<compile_context>
chip_gen: v5e
topology: v5e:2x2
jax: 0.10.0
libtpu: 0.0.40
codegen_flags: <defaults>
</compile_context>

<pallas_src>
import functools

import jax
import jax.numpy as jnp
from jax.experimental import pallas as pl
from jax.experimental.pallas import tpu as pltpu


def _crf_kernel(em_ref, pk_ref, len_ref, start_ref, trans_ref, end_ref,
                llh_ref, norm_ref, num_ref, *, chunk: int):
    """One (batch_block, time_chunk) grid step of the CRF forward pass.

    em_ref   : (chunk, bb, T) f32   emissions for this time chunk / batch block
    pk_ref   : (1, bb, chunk) i32   packed tags: (tag_prev << 16) | tag_cur
    len_ref  : (bb, 1)        i32   valid sequence length per batch row
    start_ref: (1, T) f32 ; trans_ref: (T, T) f32 ; end_ref: (1, T) f32
    llh_ref  : (bb, 1) f32          per-sequence log-likelihood (written at last chunk)
    norm_ref : (bb, T) f32 scratch  forward log-potentials (carried across chunks)
    num_ref  : (bb, 1) f32 scratch  gold-path score accumulator
    """
    c = pl.program_id(1)                       # time-chunk index ("arbitrary" axis)
    bb, T = norm_ref.shape

    start = start_ref[...]                     # (1, T)
    end = end_ref[...]                         # (1, T)
    trans = trans_ref[...]                     # (T, T)
    lens = len_ref[...]                        # (bb, 1) int32

    # Loop invariants (hoisted): lane iota for one-hots, shifted exp(trans).
    lane = jax.lax.broadcasted_iota(jnp.int32, (bb, T), 1)
    max_t = jnp.max(trans)
    exp_t = jnp.exp(trans - max_t)             # (T, T)

    # First time-chunk of this batch block: init recursion state + accumulator.
    @pl.when(c == 0)
    def _():
        norm_ref[...] = start + em_ref[0]      # alpha_0 = start + emissions[0]
        num_ref[...] = jnp.zeros_like(num_ref)

    norm = norm_ref[...]                       # (bb, T)
    num = num_ref[...]                         # (bb, 1)
    pk_blk = pk_ref[0]                         # (bb, chunk) int32
    c_off = c * chunk

    # Short statically-unrolled per-chunk time loop; the grid axis bounds total
    # program size / live ranges (reviewer: modest unroll, not full-S unroll).
    for i in range(chunk):
        g = c_off + i                          # global time step (traced scalar)
        em_i = em_ref[i]                       # (bb, T)

        # ---- numerator (_compute_score): one-hot gathers, 1 MXU matmul, 1 lane-reduce
        pk_col = pk_blk[:, i:i + 1]            # (bb, 1), static slice
        tag_cur = jnp.bitwise_and(pk_col, 0xFFFF)
        tag_prev = jnp.right_shift(pk_col, 16)
        oh_cur = (lane == tag_cur).astype(jnp.float32)     # (bb, T)
        oh_prev = (lane == tag_prev).astype(jnp.float32)   # (bb, T)

        mask_f = (g < lens).astype(jnp.float32)            # (bb, 1)
        last_f = (g == lens - 1).astype(jnp.float32)       # (bb, 1)
        first_f = (g == 0).astype(jnp.float32)             # scalar

        t_rows = jnp.dot(oh_prev, trans,
                         preferred_element_type=jnp.float32)   # (bb, T)
        gath = (em_i * mask_f
                + start * first_f
                + t_rows * (mask_f * (1.0 - first_f))
                + end * last_f)                                # (bb, T), fused
        num = num + jnp.sum(oh_cur * gath, axis=1, keepdims=True)

        # ---- denominator (_compute_normalizer): shifted exp-matmul logsumexp (MXU + EUP)
        row_max = jnp.max(norm, axis=1, keepdims=True)                  # (bb, 1)
        p = jnp.exp(norm - row_max)                                     # (bb, T)
        s = jnp.dot(p, exp_t, preferred_element_type=jnp.float32)       # (bb, T)
        nxt = row_max + max_t + jnp.log(jnp.maximum(s, 1e-30)) + em_i   # eps clamp
        upd = jnp.logical_and(g >= 1, g < lens)                         # (bb, 1)
        norm = jnp.where(upd, nxt, norm)

    norm_ref[...] = norm
    num_ref[...] = num

    # Last time-chunk: finish normalizer and emit per-sequence log-likelihood.
    @pl.when(c == pl.num_programs(1) - 1)
    def _():
        fin = norm + end                                        # (bb, T)
        m_fin = jnp.max(fin, axis=1, keepdims=True)
        denom = m_fin + jnp.log(jnp.sum(jnp.exp(fin - m_fin),
                                        axis=1, keepdims=True))  # (bb, 1)
        llh_ref[...] = num - denom


def crf_forward(emissions, tags, start_transitions, transitions,
                end_transitions, mask=None, reduction='sum',
                *, time_chunk=8, batch_block=128):
    """JAX/Pallas equivalent of torchcrf CRF.forward (batch_first=False layout)."""
    S, B, T = emissions.shape
    assert tags.shape == (S, B)
    if mask is None:
        mask_f = jnp.ones((S, B), dtype=jnp.float32)
    else:
        mask_f = mask.astype(jnp.float32)
    tags_i = tags.astype(jnp.int32)
    lens = mask_f.astype(jnp.int32).sum(axis=0)                  # (B,)

    chunk = max(1, int(time_chunk))
    S_pad = ((S + chunk - 1) // chunk) * chunk
    n_chunks = S_pad // chunk

    B8 = ((B + 7) // 8) * 8
    bb = min(max(8, int(batch_block)), B8)
    bb = max(8, (bb // 8) * 8)
    B_pad = ((B8 + bb - 1) // bb) * bb
    n_bb = B_pad // bb

    # ---- glue (all O(S*B), tags/lengths are tiny) ----
    em32 = emissions.astype(jnp.float32)
    if S_pad == S and B_pad == B:
        em_full = em32
    else:
        em_full = jnp.zeros((S_pad, B_pad, T), jnp.float32).at[:S, :B, :].set(em32)

    tag_cur = jnp.zeros((S_pad, B_pad), jnp.int32).at[:S, :B].set(tags_i)
    tag_prev = jnp.zeros((S_pad, B_pad), jnp.int32).at[1:S, :B].set(tags_i[:-1])
    packed = jnp.left_shift(tag_prev, 16) | tag_cur              # (S_pad, B_pad)
    packed3 = packed.reshape(n_chunks, chunk, B_pad).transpose(0, 2, 1)  # (C, B_pad, chunk)

    # Padded batch rows get length 1 (mask[0]==1 contract); results are sliced off.
    lens_col = jnp.ones((B_pad,), jnp.int32).at[:B].set(lens).reshape(B_pad, 1)

    start2 = start_transitions.astype(jnp.float32).reshape(1, T)
    end2 = end_transitions.astype(jnp.float32).reshape(1, T)
    trans2 = transitions.astype(jnp.float32)

    # Rough per-step VMEM footprint (double-buffered blocks + scratch), with headroom.
    vmem_est = (2 * chunk * bb * T * 4 + 2 * bb * chunk * 4
                + bb * T * 4 + 2 * bb * 4 + (T * T + 2 * T) * 4)
    vmem_limit = int(min(64 * 1024 * 1024, max(16 * 1024 * 1024, 8 * vmem_est)))

    kern = functools.partial(_crf_kernel, chunk=chunk)
    llh_pad = pl.pallas_call(
        kern,
        out_shape=jax.ShapeDtypeStruct((B_pad, 1), jnp.float32),
        grid_spec=pltpu.PrefetchScalarGridSpec(
            num_scalar_prefetch=0,
            grid=(n_bb, n_chunks),
            in_specs=[
                pl.BlockSpec((chunk, bb, T), lambda b, c: (c, b, 0)),   # emissions
                pl.BlockSpec((1, bb, chunk), lambda b, c: (c, b, 0)),   # packed tags
                pl.BlockSpec((bb, 1), lambda b, c: (b, 0)),             # lengths
                pl.BlockSpec((1, T), lambda b, c: (0, 0)),              # start
                pl.BlockSpec((T, T), lambda b, c: (0, 0)),              # transitions
                pl.BlockSpec((1, T), lambda b, c: (0, 0)),              # end
            ],
            out_specs=pl.BlockSpec((bb, 1), lambda b, c: (b, 0)),
            scratch_shapes=[pltpu.VMEM((bb, T), jnp.float32),           # norm carry
                            pltpu.VMEM((bb, 1), jnp.float32)],          # numerator acc
        ),
        compiler_params=pltpu.CompilerParams(
            dimension_semantics=("parallel", "arbitrary"),
            vmem_limit_bytes=vmem_limit),
    )(em_full, packed3, lens_col, start2, trans2, end2)

    llh = llh_pad[:B, 0]                                          # (B,)
    if reduction == 'none':
        return llh
    if reduction == 'sum':
        return llh.sum()
    if reduction == 'mean':
        return llh.mean()
    assert reduction == 'token_mean'
    return llh.sum() / mask_f.sum()


def crf_forward_ref(emissions, tags, start, trans, end, mask=None):
    """Pure-JAX reference (faithful torchcrf translation); returns per-sequence llh."""
    S, B, T = emissions.shape
    if mask is None:
        mask = jnp.ones((S, B), dtype=jnp.float32)
    mask = mask.astype(jnp.float32)
    # numerator
    score = start[tags[0]] + emissions[0, jnp.arange(B), tags[0]]
    for i in range(1, S):
        score = score + trans[tags[i - 1], tags[i]] * mask[i]
        score = score + emissions[i, jnp.arange(B), tags[i]] * mask[i]
    seq_ends = mask.astype(jnp.int32).sum(0) - 1
    last_tags = tags[seq_ends, jnp.arange(B)]
    score = score + end[last_tags]
    # denominator
    nscore = start + emissions[0]
    for i in range(1, S):
        nxt = jax.nn.logsumexp(
            nscore[:, :, None] + trans[None, :, :] + emissions[i][:, None, :],
            axis=1)
        nscore = jnp.where(mask[i][:, None] > 0, nxt, nscore)
    denom = jax.nn.logsumexp(nscore + end, axis=1)
    return score - denom


if __name__ == "__main__":
    key = jax.random.PRNGKey(0)
    k_em, k_s, k_e, k_t, k_em2, k_tag2, k_em3, k_tag3, k_len3 = jax.random.split(key, 9)

    # ---- test 1: the module's spec shapes (S=3, B=2, T=5), no mask, sum ----
    seq_length, batch_size, num_tags = 3, 2, 5
    emissions = jax.random.normal(k_em, (seq_length, batch_size, num_tags),
                                  dtype=jnp.float32)
    tags = jnp.array([[0, 1], [2, 4], [3, 1]], dtype=jnp.int32)
    start_transitions = jax.random.uniform(k_s, (num_tags,), minval=-0.1, maxval=0.1)
    end_transitions = jax.random.uniform(k_e, (num_tags,), minval=-0.1, maxval=0.1)
    transitions = jax.random.uniform(k_t, (num_tags, num_tags), minval=-0.1, maxval=0.1)

    out1 = crf_forward(emissions, tags, start_transitions, transitions,
                       end_transitions, mask=None, reduction='sum')
    out1 = jax.block_until_ready(out1)
    ref1 = crf_forward_ref(emissions, tags, start_transitions, transitions,
                           end_transitions).sum()
    assert jnp.allclose(out1, ref1, atol=2e-2, rtol=2e-3), (out1, ref1)

    # ---- test 2: ragged mask, multiple time chunks (carry across grid steps) ----
    S2, B2 = 10, 5
    em2 = jax.random.normal(k_em2, (S2, B2, num_tags), dtype=jnp.float32)
    tags2 = jax.random.randint(k_tag2, (S2, B2), 0, num_tags, dtype=jnp.int32)
    lens2 = jnp.array([10, 7, 3, 1, 5], dtype=jnp.int32)
    mask2 = (jnp.arange(S2, dtype=jnp.int32)[:, None] < lens2[None, :]).astype(jnp.uint8)
    out2 = crf_forward(em2, tags2, start_transitions, transitions, end_transitions,
                       mask=mask2, reduction='none', time_chunk=4)
    out2 = jax.block_until_ready(out2)
    ref2 = crf_forward_ref(em2, tags2, start_transitions, transitions,
                           end_transitions, mask=mask2)
    assert jnp.allclose(out2, ref2, atol=2e-2, rtol=2e-3), (out2, ref2)

    # ---- test 3: multiple batch blocks (parallel axis) + multiple time chunks ----
    S3, B3, T3 = 20, 20, 7
    em3 = jax.random.normal(k_em3, (S3, B3, T3), dtype=jnp.float32)
    tags3 = jax.random.randint(k_tag3, (S3, B3), 0, T3, dtype=jnp.int32)
    lens3 = jax.random.randint(k_len3, (B3,), 1, S3 + 1, dtype=jnp.int32)
    mask3 = (jnp.arange(S3, dtype=jnp.int32)[:, None] < lens3[None, :]).astype(jnp.uint8)
    st3 = jax.random.uniform(k_s, (T3,), minval=-0.1, maxval=0.1)
    en3 = jax.random.uniform(k_e, (T3,), minval=-0.1, maxval=0.1)
    tr3 = jax.random.uniform(k_t, (T3, T3), minval=-0.1, maxval=0.1)
    out3 = crf_forward(em3, tags3, st3, tr3, en3, mask=mask3, reduction='none',
                       time_chunk=8, batch_block=8)
    out3 = jax.block_until_ready(out3)
    ref3 = crf_forward_ref(em3, tags3, st3, tr3, en3, mask=mask3)
    assert jnp.allclose(out3, ref3, atol=2e-2, rtol=2e-3), (out3, ref3)

    print("KERNEL_OK")
</pallas_src>

<mosaic_0001>
module attributes {stable_mosaic.version = 11 : i64} {
  func.func @_crf_kernel(%arg0: i32, %arg1: i32, %arg2: memref<8x8x5xf32, #tpu.memory_space<vmem>>, %arg3: memref<1x8x8xi32, #tpu.memory_space<vmem>>, %arg4: memref<8x1xi32, #tpu.memory_space<vmem>>, %arg5: memref<1x5xf32, #tpu.memory_space<vmem>>, %arg6: memref<5x5xf32, #tpu.memory_space<vmem>>, %arg7: memref<1x5xf32, #tpu.memory_space<vmem>>, %arg8: memref<8x1xf32, #tpu.memory_space<vmem>>, %arg9: memref<8x5xf32, #tpu.memory_space<vmem>>, %arg10: memref<8x1xf32, #tpu.memory_space<vmem>>) attributes {dimension_semantics = [#tpu.dimension_semantics<parallel>, #tpu.dimension_semantics<arbitrary>], iteration_bounds = array<i64: 1, 1>, scalar_prefetch = 0 : i64, scratch_operands = 2 : i64, tpu.core_type = #tpu.core_type<tc>, window_params = [{transform_indices = @transform_0, window_bounds = array<i64: 8, 8, 5>}, {transform_indices = @transform_1, window_bounds = array<i64: 1, 8, 8>}, {transform_indices = @transform_2, window_bounds = array<i64: 8, 1>}, {pipeline_mode = #tpu.pipeline_mode<synchronous>, transform_indices = @transform_3, window_bounds = array<i64: 1, 5>}, {pipeline_mode = #tpu.pipeline_mode<synchronous>, transform_indices = @transform_4, window_bounds = array<i64: 5, 5>}, {pipeline_mode = #tpu.pipeline_mode<synchronous>, transform_indices = @transform_5, window_bounds = array<i64: 1, 5>}, {transform_indices = @transform_6, window_bounds = array<i64: 8, 1>}]} {
    %c0 = arith.constant 0 : index
    %c0_0 = arith.constant 0 : index
    %0 = vector.load %arg5[%c0, %c0_0] : memref<1x5xf32, #tpu.memory_space<vmem>>, vector<1x5xf32>
    %c0_1 = arith.constant 0 : index
    %c0_2 = arith.constant 0 : index
    %1 = vector.load %arg7[%c0_1, %c0_2] : memref<1x5xf32, #tpu.memory_space<vmem>>, vector<1x5xf32>
    %c0_3 = arith.constant 0 : index
    %c0_4 = arith.constant 0 : index
    %2 = vector.load %arg6[%c0_3, %c0_4] : memref<5x5xf32, #tpu.memory_space<vmem>>, vector<5x5xf32>
    %c0_5 = arith.constant 0 : index
    %c0_6 = arith.constant 0 : index
    %3 = vector.load %arg4[%c0_5, %c0_6] : memref<8x1xi32, #tpu.memory_space<vmem>>, vector<8x1xi32>
    %4 = tpu.iota {dimensions = array<i32: 1>} : vector<8x5xi32>
    %5 = vector.shape_cast %2 : vector<5x5xf32> to vector<1x5x5xf32>
    %cst = arith.constant dense<0xFF800000> : vector<1xf32>
    %6 = vector.multi_reduction <maximumf>, %5, %cst [1, 2] : vector<1x5x5xf32> to vector<1xf32>
    %7 = vector.shape_cast %6 : vector<1xf32> to vector<1x1x1xf32>
    %8 = vector.extract %7[0, 0, 0] : f32 from vector<1x1x1xf32>
    %9 = vector.broadcast %8 : f32 to vector<5x5xf32>
    %10 = arith.subf %2, %9 : vector<5x5xf32>
    %11 = math.exp %10 : vector<5x5xf32>
    %c0_i32 = arith.constant 0 : i32
    %12 = arith.cmpi eq, %arg1, %c0_i32 : i32
    %13 = arith.extui %12 : i1 to i32
    %c0_i32_7 = arith.constant 0 : i32
    %14 = arith.cmpi ne, %13, %c0_i32_7 : i32
    scf.if %14 {
      %c0_125 = arith.constant 0 : index
      %c0_126 = arith.constant 0 : index
      %c0_127 = arith.constant 0 : index
      %601 = vector.load %arg2[%c0_125, %c0_126, %c0_127] : memref<8x8x5xf32, #tpu.memory_space<vmem>>, vector<1x8x5xf32>
      %602 = vector.shape_cast %601 : vector<1x8x5xf32> to vector<8x5xf32>
      %603 = vector.broadcast %0 : vector<1x5xf32> to vector<8x5xf32>
      %604 = arith.addf %603, %602 : vector<8x5xf32>
      %c0_128 = arith.constant 0 : index
      %c0_129 = arith.constant 0 : index
      %605 = vector.load %arg9[%c0_128, %c0_129] : memref<8x5xf32, #tpu.memory_space<vmem>>, vector<8x5xf32>
      tpu.vector_store %arg9[%c0_128, %c0_129], %604 {strides = array<i32>} : memref<8x5xf32, #tpu.memory_space<vmem>>, vector<8x5xf32>,
      %cst_130 = arith.constant 0.000000e+00 : f32
      %606 = vector.broadcast %cst_130 : f32 to vector<8x1xf32>
      %c0_131 = arith.constant 0 : index
      %c0_132 = arith.constant 0 : index
      %607 = vector.load %arg10[%c0_131, %c0_132] : memref<8x1xf32, #tpu.memory_space<vmem>>, vector<8x1xf32>
      tpu.vector_store %arg10[%c0_131, %c0_132], %606 {strides = array<i32>} : memref<8x1xf32, #tpu.memory_space<vmem>>, vector<8x1xf32>,
    } else {
    }
    %c0_8 = arith.constant 0 : index
    %c0_9 = arith.constant 0 : index
    %15 = vector.load %arg9[%c0_8, %c0_9] : memref<8x5xf32, #tpu.memory_space<vmem>>, vector<8x5xf32>
    %c0_10 = arith.constant 0 : index
    %c0_11 = arith.constant 0 : index
    %16 = vector.load %arg10[%c0_10, %c0_11] : memref<8x1xf32, #tpu.memory_space<vmem>>, vector<8x1xf32>
    %c0_12 = arith.constant 0 : index
    %c0_13 = arith.constant 0 : index
    %c0_14 = arith.constant 0 : index
    %17 = vector.load %arg3[%c0_12, %c0_13, %c0_14] : memref<1x8x8xi32, #tpu.memory_space<vmem>>, vector<1x8x8xi32>
    %18 = vector.shape_cast %17 : vector<1x8x8xi32> to vector<8x8xi32>
    %c8_i32 = arith.constant 8 : i32
    %19 = arith.muli %arg1, %c8_i32 : i32
    %c0_i32_15 = arith.constant 0 : i32
    %20 = arith.addi %19, %c0_i32_15 : i32
    %c0_16 = arith.constant 0 : index
    %c0_17 = arith.constant 0 : index
    %c0_18 = arith.constant 0 : index
    %21 = vector.load %arg2[%c0_16, %c0_17, %c0_18] : memref<8x8x5xf32, #tpu.memory_space<vmem>>, vector<1x8x5xf32>
    %22 = vector.shape_cast %21 : vector<1x8x5xf32> to vector<8x5xf32>
    %23 = vector.extract_strided_slice %18 {offsets = [0, 0], sizes = [8, 1], strides = [1, 1]} : vector<8x8xi32> to vector<8x1xi32>
    %c65535_i32 = arith.constant 65535 : i32
    %24 = vector.broadcast %c65535_i32 : i32 to vector<8x1xi32>
    %25 = arith.andi %23, %24 : vector<8x1xi32>
    %c16_i32 = arith.constant 16 : i32
    %26 = vector.broadcast %c16_i32 : i32 to vector<8x1xi32>
    %27 = arith.shrsi %23, %26 : vector<8x1xi32>
    %28 = vector.broadcast %25 : vector<8x1xi32> to vector<8x5xi32>
    %29 = arith.cmpi eq, %4, %28 : vector<8x5xi32>
    %30 = arith.extui %29 : vector<8x5xi1> to vector<8x5xi32>
    %31 = arith.sitofp %30 : vector<8x5xi32> to vector<8x5xf32>
    %32 = vector.broadcast %27 : vector<8x1xi32> to vector<8x5xi32>
    %33 = arith.cmpi eq, %4, %32 : vector<8x5xi32>
    %34 = arith.extui %33 : vector<8x5xi1> to vector<8x5xi32>
    %35 = arith.sitofp %34 : vector<8x5xi32> to vector<8x5xf32>
    %36 = vector.broadcast %20 : i32 to vector<8x1xi32>
    %37 = arith.cmpi slt, %36, %3 : vector<8x1xi32>
    %38 = arith.extui %37 : vector<8x1xi1> to vector<8x1xi32>
    %39 = arith.sitofp %38 : vector<8x1xi32> to vector<8x1xf32>
    %c1_i32 = arith.constant 1 : i32
    %40 = vector.broadcast %c1_i32 : i32 to vector<8x1xi32>
    %41 = arith.subi %3, %40 : vector<8x1xi32>
    %42 = vector.broadcast %20 : i32 to vector<8x1xi32>
    %43 = arith.cmpi eq, %42, %41 : vector<8x1xi32>
    %44 = arith.extui %43 : vector<8x1xi1> to vector<8x1xi32>
    %45 = arith.sitofp %44 : vector<8x1xi32> to vector<8x1xf32>
    %c0_i32_19 = arith.constant 0 : i32
    %46 = arith.cmpi eq, %20, %c0_i32_19 : i32
    %47 = arith.extui %46 : i1 to i32
    %48 = arith.sitofp %47 : i32 to f32
    %cst_20 = arith.constant dense<0.000000e+00> : vector<8x5xf32>
    %49 = tpu.matmul %35, %2, %cst_20 {dimension_numbers = #tpu.dot_dimension_numbers<[1], [0], [0], [1], [0, 0, 1, 1], [], []>} : vector<8x5xf32>, vector<5x5xf32>, vector<8x5xf32> -> vector<8x5xf32>
    %50 = vector.broadcast %39 : vector<8x1xf32> to vector<8x5xf32>
    %51 = arith.mulf %22, %50 : vector<8x5xf32>
    %52 = vector.broadcast %48 : f32 to vector<1x5xf32>
    %53 = arith.mulf %0, %52 : vector<1x5xf32>
    %54 = vector.broadcast %53 : vector<1x5xf32> to vector<8x5xf32>
    %55 = arith.addf %51, %54 : vector<8x5xf32>
    %cst_21 = arith.constant 1.000000e+00 : f32
    %56 = arith.subf %cst_21, %48 : f32
    %57 = vector.broadcast %56 : f32 to vector<8x1xf32>
    %58 = arith.mulf %39, %57 : vector<8x1xf32>
    %59 = vector.broadcast %58 : vector<8x1xf32> to vector<8x5xf32>
    %60 = arith.mulf %49, %59 : vector<8x5xf32>
    %61 = arith.addf %55, %60 : vector<8x5xf32>
    %62 = vector.broadcast %1 : vector<1x5xf32> to vector<8x5xf32>
    %63 = vector.broadcast %45 : vector<8x1xf32> to vector<8x5xf32>
    %64 = arith.mulf %62, %63 : vector<8x5xf32>
    %65 = arith.addf %61, %64 : vector<8x5xf32>
    %66 = arith.mulf %31, %65 : vector<8x5xf32>
    %cst_22 = arith.constant dense<0.000000e+00> : vector<8xf32>
    %67 = vector.multi_reduction <add>, %66, %cst_22 [1] : vector<8x5xf32> to vector<8xf32>
    %68 = vector.shape_cast %67 : vector<8xf32> to vector<8x1xf32>
    %69 = arith.addf %16, %68 : vector<8x1xf32>
    %cst_23 = arith.constant dense<0xFF800000> : vector<8xf32>
    %70 = vector.multi_reduction <maximumf>, %15, %cst_23 [1] : vector<8x5xf32> to vector<8xf32>
    %71 = vector.shape_cast %70 : vector<8xf32> to vector<8x1xf32>
    %72 = vector.broadcast %71 : vector<8x1xf32> to vector<8x5xf32>
    %73 = arith.subf %15, %72 : vector<8x5xf32>
    %74 = math.exp %73 : vector<8x5xf32>
    %cst_24 = arith.constant dense<0.000000e+00> : vector<8x5xf32>
    %75 = tpu.matmul %74, %11, %cst_24 {dimension_numbers = #tpu.dot_dimension_numbers<[1], [0], [0], [1], [0, 0, 1, 1], [], []>} : vector<8x5xf32>, vector<5x5xf32>, vector<8x5xf32> -> vector<8x5xf32>
    %76 = vector.broadcast %8 : f32 to vector<8x1xf32>
    %77 = arith.addf %71, %76 : vector<8x1xf32>
    %cst_25 = arith.constant 1.000000e-30 : f32
    %78 = vector.broadcast %cst_25 : f32 to vector<8x5xf32>
    %79 = arith.maximumf %75, %78 : vector<8x5xf32>
    %80 = math.log %79 : vector<8x5xf32>
    %81 = vector.broadcast %77 : vector<8x1xf32> to vector<8x5xf32>
    %82 = arith.addf %81, %80 : vector<8x5xf32>
    %83 = arith.addf %82, %22 : vector<8x5xf32>
    %c1_i32_26 = arith.constant 1 : i32
    %84 = arith.cmpi sge, %20, %c1_i32_26 : i32
    %85 = vector.broadcast %20 : i32 to vector<8x1xi32>
    %86 = arith.cmpi slt, %85, %3 : vector<8x1xi32>
    %87 = vector.broadcast %84 : i1 to vector<8x1xi1>
    %88 = arith.andi %87, %86 : vector<8x1xi1>
    %89 = vector.shape_cast %88 : vector<8x1xi1> to vector<8x1xi1>
    %90 = vector.broadcast %89 : vector<8x1xi1> to vector<8x5xi1>
    %91 = arith.select %90, %83, %15 : vector<8x5xi1>, vector<8x5xf32>
    %c1_i32_27 = arith.constant 1 : i32
    %92 = arith.addi %19, %c1_i32_27 : i32
    %c1 = arith.constant 1 : index
    %c0_28 = arith.constant 0 : index
    %c0_29 = arith.constant 0 : index
    %93 = vector.load %arg2[%c1, %c0_28, %c0_29] : memref<8x8x5xf32, #tpu.memory_space<vmem>>, vector<1x8x5xf32>
    %94 = vector.shape_cast %93 : vector<1x8x5xf32> to vector<8x5xf32>
    %95 = vector.extract_strided_slice %18 {offsets = [0, 1], sizes = [8, 1], strides = [1, 1]} : vector<8x8xi32> to vector<8x1xi32>
    %c65535_i32_30 = arith.constant 65535 : i32
    %96 = vector.broadcast %c65535_i32_30 : i32 to vector<8x1xi32>
    %97 = arith.andi %95, %96 : vector<8x1xi32>
    %c16_i32_31 = arith.constant 16 : i32
    %98 = vector.broadcast %c16_i32_31 : i32 to vector<8x1xi32>
    %99 = arith.shrsi %95, %98 : vector<8x1xi32>
    %100 = vector.broadcast %97 : vector<8x1xi32> to vector<8x5xi32>
    %101 = arith.cmpi eq, %4, %100 : vector<8x5xi32>
    %102 = arith.extui %101 : vector<8x5xi1> to vector<8x5xi32>
    %103 = arith.sitofp %102 : vector<8x5xi32> to vector<8x5xf32>
    %104 = vector.broadcast %99 : vector<8x1xi32> to vector<8x5xi32>
    %105 = arith.cmpi eq, %4, %104 : vector<8x5xi32>
    %106 = arith.extui %105 : vector<8x5xi1> to vector<8x5xi32>
    %107 = arith.sitofp %106 : vector<8x5xi32> to vector<8x5xf32>
    %108 = vector.broadcast %92 : i32 to vector<8x1xi32>
    %109 = arith.cmpi slt, %108, %3 : vector<8x1xi32>
    %110 = arith.extui %109 : vector<8x1xi1> to vector<8x1xi32>
    %111 = arith.sitofp %110 : vector<8x1xi32> to vector<8x1xf32>
    %c1_i32_32 = arith.constant 1 : i32
    %112 = vector.broadcast %c1_i32_32 : i32 to vector<8x1xi32>
    %113 = arith.subi %3, %112 : vector<8x1xi32>
    %114 = vector.broadcast %92 : i32 to vector<8x1xi32>
    %115 = arith.cmpi eq, %114, %113 : vector<8x1xi32>
    %116 = arith.extui %115 : vector<8x1xi1> to vector<8x1xi32>
    %117 = arith.sitofp %116 : vector<8x1xi32> to vector<8x1xf32>
    %c0_i32_33 = arith.constant 0 : i32
    %118 = arith.cmpi eq, %92, %c0_i32_33 : i32
    %119 = arith.extui %118 : i1 to i32
    %120 = arith.sitofp %119 : i32 to f32
    %cst_34 = arith.constant dense<0.000000e+00> : vector<8x5xf32>
    %121 = tpu.matmul %107, %2, %cst_34 {dimension_numbers = #tpu.dot_dimension_numbers<[1], [0], [0], [1], [0, 0, 1, 1], [], []>} : vector<8x5xf32>, vector<5x5xf32>, vector<8x5xf32> -> vector<8x5xf32>
    %122 = vector.broadcast %111 : vector<8x1xf32> to vector<8x5xf32>
    %123 = arith.mulf %94, %122 : vector<8x5xf32>
    %124 = vector.broadcast %120 : f32 to vector<1x5xf32>
    %125 = arith.mulf %0, %124 : vector<1x5xf32>
    %126 = vector.broadcast %125 : vector<1x5xf32> to vector<8x5xf32>
    %127 = arith.addf %123, %126 : vector<8x5xf32>
    %cst_35 = arith.constant 1.000000e+00 : f32
    %128 = arith.subf %cst_35, %120 : f32
    %129 = vector.broadcast %128 : f32 to vector<8x1xf32>
    %130 = arith.mulf %111, %129 : vector<8x1xf32>
    %131 = vector.broadcast %130 : vector<8x1xf32> to vector<8x5xf32>
    %132 = arith.mulf %121, %131 : vector<8x5xf32>
    %133 = arith.addf %127, %132 : vector<8x5xf32>
    %134 = vector.broadcast %1 : vector<1x5xf32> to vector<8x5xf32>
    %135 = vector.broadcast %117 : vector<8x1xf32> to vector<8x5xf32>
    %136 = arith.mulf %134, %135 : vector<8x5xf32>
    %137 = arith.addf %133, %136 : vector<8x5xf32>
    %138 = arith.mulf %103, %137 : vector<8x5xf32>
    %cst_36 = arith.constant dense<0.000000e+00> : vector<8xf32>
    %139 = vector.multi_reduction <add>, %138, %cst_36 [1] : vector<8x5xf32> to vector<8xf32>
    %140 = vector.shape_cast %139 : vector<8xf32> to vector<8x1xf32>
    %141 = arith.addf %69, %140 : vector<8x1xf32>
    %cst_37 = arith.constant dense<0xFF800000> : vector<8xf32>
    %142 = vector.multi_reduction <maximumf>, %91, %cst_37 [1] : vector<8x5xf32> to vector<8xf32>
    %143 = vector.shape_cast %142 : vector<8xf32> to vector<8x1xf32>
    %144 = vector.broadcast %143 : vector<8x1xf32> to vector<8x5xf32>
    %145 = arith.subf %91, %144 : vector<8x5xf32>
    %146 = math.exp %145 : vector<8x5xf32>
    %cst_38 = arith.constant dense<0.000000e+00> : vector<8x5xf32>
    %147 = tpu.matmul %146, %11, %cst_38 {dimension_numbers = #tpu.dot_dimension_numbers<[1], [0], [0], [1], [0, 0, 1, 1], [], []>} : vector<8x5xf32>, vector<5x5xf32>, vector<8x5xf32> -> vector<8x5xf32>
    %148 = vector.broadcast %8 : f32 to vector<8x1xf32>
    %149 = arith.addf %143, %148 : vector<8x1xf32>
    %cst_39 = arith.constant 1.000000e-30 : f32
    %150 = vector.broadcast %cst_39 : f32 to vector<8x5xf32>
    %151 = arith.maximumf %147, %150 : vector<8x5xf32>
    %152 = math.log %151 : vector<8x5xf32>
    %153 = vector.broadcast %149 : vector<8x1xf32> to vector<8x5xf32>
    %154 = arith.addf %153, %152 : vector<8x5xf32>
    %155 = arith.addf %154, %94 : vector<8x5xf32>
    %c1_i32_40 = arith.constant 1 : i32
    %156 = arith.cmpi sge, %92, %c1_i32_40 : i32
    %157 = vector.broadcast %92 : i32 to vector<8x1xi32>
    %158 = arith.cmpi slt, %157, %3 : vector<8x1xi32>
    %159 = vector.broadcast %156 : i1 to vector<8x1xi1>
    %160 = arith.andi %159, %158 : vector<8x1xi1>
    %161 = vector.shape_cast %160 : vector<8x1xi1> to vector<8x1xi1>
    %162 = vector.broadcast %161 : vector<8x1xi1> to vector<8x5xi1>
    %163 = arith.select %162, %155, %91 : vector<8x5xi1>, vector<8x5xf32>
    %c2_i32 = arith.constant 2 : i32
    %164 = arith.addi %19, %c2_i32 : i32
    %c2 = arith.constant 2 : index
    %c0_41 = arith.constant 0 : index
    %c0_42 = arith.constant 0 : index
    %165 = vector.load %arg2[%c2, %c0_41, %c0_42] : memref<8x8x5xf32, #tpu.memory_space<vmem>>, vector<1x8x5xf32>
    %166 = vector.shape_cast %165 : vector<1x8x5xf32> to vector<8x5xf32>
    %167 = vector.extract_strided_slice %18 {offsets = [0, 2], sizes = [8, 1], strides = [1, 1]} : vector<8x8xi32> to vector<8x1xi32>
    %c65535_i32_43 = arith.constant 65535 : i32
    %168 = vector.broadcast %c65535_i32_43 : i32 to vector<8x1xi32>
    %169 = arith.andi %167, %168 : vector<8x1xi32>
    %c16_i32_44 = arith.constant 16 : i32
    %170 = vector.broadcast %c16_i32_44 : i32 to vector<8x1xi32>
    %171 = arith.shrsi %167, %170 : vector<8x1xi32>
    %172 = vector.broadcast %169 : vector<8x1xi32> to vector<8x5xi32>
    %173 = arith.cmpi eq, %4, %172 : vector<8x5xi32>
    %174 = arith.extui %173 : vector<8x5xi1> to vector<8x5xi32>
    %175 = arith.sitofp %174 : vector<8x5xi32> to vector<8x5xf32>
    %176 = vector.broadcast %171 : vector<8x1xi32> to vector<8x5xi32>
    %177 = arith.cmpi eq, %4, %176 : vector<8x5xi32>
    %178 = arith.extui %177 : vector<8x5xi1> to vector<8x5xi32>
    %179 = arith.sitofp %178 : vector<8x5xi32> to vector<8x5xf32>
    %180 = vector.broadcast %164 : i32 to vector<8x1xi32>
    %181 = arith.cmpi slt, %180, %3 : vector<8x1xi32>
    %182 = arith.extui %181 : vector<8x1xi1> to vector<8x1xi32>
    %183 = arith.sitofp %182 : vector<8x1xi32> to vector<8x1xf32>
    %c1_i32_45 = arith.constant 1 : i32
    %184 = vector.broadcast %c1_i32_45 : i32 to vector<8x1xi32>
    %185 = arith.subi %3, %184 : vector<8x1xi32>
    %186 = vector.broadcast %164 : i32 to vector<8x1xi32>
    %187 = arith.cmpi eq, %186, %185 : vector<8x1xi32>
    %188 = arith.extui %187 : vector<8x1xi1> to vector<8x1xi32>
    %189 = arith.sitofp %188 : vector<8x1xi32> to vector<8x1xf32>
    %c0_i32_46 = arith.constant 0 : i32
    %190 = arith.cmpi eq, %164, %c0_i32_46 : i32
    %191 = arith.extui %190 : i1 to i32
    %192 = arith.sitofp %191 : i32 to f32
    %cst_47 = arith.constant dense<0.000000e+00> : vector<8x5xf32>
    %193 = tpu.matmul %179, %2, %cst_47 {dimension_numbers = #tpu.dot_dimension_numbers<[1], [0], [0], [1], [0, 0, 1, 1], [], []>} : vector<8x5xf32>, vector<5x5xf32>, vector<8x5xf32> -> vector<8x5xf32>
    %194 = vector.broadcast %183 : vector<8x1xf32> to vector<8x5xf32>
    %195 = arith.mulf %166, %194 : vector<8x5xf32>
    %196 = vector.broadcast %192 : f32 to vector<1x5xf32>
    %197 = arith.mulf %0, %196 : vector<1x5xf32>
    %198 = vector.broadcast %197 : vector<1x5xf32> to vector<8x5xf32>
    %199 = arith.addf %195, %198 : vector<8x5xf32>
    %cst_48 = arith.constant 1.000000e+00 : f32
    %200 = arith.subf %cst_48, %192 : f32
    %201 = vector.broadcast %200 : f32 to vector<8x1xf32>
    %202 = arith.mulf %183, %201 : vector<8x1xf32>
    %203 = vector.broadcast %202 : vector<8x1xf32> to vector<8x5xf32>
    %204 = arith.mulf %193, %203 : vector<8x5xf32>
    %205 = arith.addf %199, %204 : vector<8x5xf32>
    %206 = vector.broadcast %1 : vector<1x5xf32> to vector<8x5xf32>
    %207 = vector.broadcast %189 : vector<8x1xf32> to vector<8x5xf32>
    %208 = arith.mulf %206, %207 : vector<8x5xf32>
    %209 = arith.addf %205, %208 : vector<8x5xf32>
    %210 = arith.mulf %175, %209 : vector<8x5xf32>
    %cst_49 = arith.constant dense<0.000000e+00> : vector<8xf32>
    %211 = vector.multi_reduction <add>, %210, %cst_49 [1] : vector<8x5xf32> to vector<8xf32>
    %212 = vector.shape_cast %211 : vector<8xf32> to vector<8x1xf32>
    %213 = arith.addf %141, %212 : vector<8x1xf32>
    %cst_50 = arith.constant dense<0xFF800000> : vector<8xf32>
    %214 = vector.multi_reduction <maximumf>, %163, %cst_50 [1] : vector<8x5xf32> to vector<8xf32>
    %215 = vector.shape_cast %214 : vector<8xf32> to vector<8x1xf32>
    %216 = vector.broadcast %215 : vector<8x1xf32> to vector<8x5xf32>
    %217 = arith.subf %163, %216 : vector<8x5xf32>
    %218 = math.exp %217 : vector<8x5xf32>
    %cst_51 = arith.constant dense<0.000000e+00> : vector<8x5xf32>
    %219 = tpu.matmul %218, %11, %cst_51 {dimension_numbers = #tpu.dot_dimension_numbers<[1], [0], [0], [1], [0, 0, 1, 1], [], []>} : vector<8x5xf32>, vector<5x5xf32>, vector<8x5xf32> -> vector<8x5xf32>
    %220 = vector.broadcast %8 : f32 to vector<8x1xf32>
    %221 = arith.addf %215, %220 : vector<8x1xf32>
    %cst_52 = arith.constant 1.000000e-30 : f32
    %222 = vector.broadcast %cst_52 : f32 to vector<8x5xf32>
    %223 = arith.maximumf %219, %222 : vector<8x5xf32>
    %224 = math.log %223 : vector<8x5xf32>
    %225 = vector.broadcast %221 : vector<8x1xf32> to vector<8x5xf32>
    %226 = arith.addf %225, %224 : vector<8x5xf32>
    %227 = arith.addf %226, %166 : vector<8x5xf32>
    %c1_i32_53 = arith.constant 1 : i32
    %228 = arith.cmpi sge, %164, %c1_i32_53 : i32
    %229 = vector.broadcast %164 : i32 to vector<8x1xi32>
    %230 = arith.cmpi slt, %229, %3 : vector<8x1xi32>
    %231 = vector.broadcast %228 : i1 to vector<8x1xi1>
    %232 = arith.andi %231, %230 : vector<8x1xi1>
    %233 = vector.shape_cast %232 : vector<8x1xi1> to vector<8x1xi1>
    %234 = vector.broadcast %233 : vector<8x1xi1> to vector<8x5xi1>
    %235 = arith.select %234, %227, %163 : vector<8x5xi1>, vector<8x5xf32>
    %c3_i32 = arith.constant 3 : i32
    %236 = arith.addi %19, %c3_i32 : i32
    %c3 = arith.constant 3 : index
    %c0_54 = arith.constant 0 : index
    %c0_55 = arith.constant 0 : index
    %237 = vector.load %arg2[%c3, %c0_54, %c0_55] : memref<8x8x5xf32, #tpu.memory_space<vmem>>, vector<1x8x5xf32>
    %238 = vector.shape_cast %237 : vector<1x8x5xf32> to vector<8x5xf32>
    %239 = vector.extract_strided_slice %18 {offsets = [0, 3], sizes = [8, 1], strides = [1, 1]} : vector<8x8xi32> to vector<8x1xi32>
    %c65535_i32_56 = arith.constant 65535 : i32
    %240 = vector.broadcast %c65535_i32_56 : i32 to vector<8x1xi32>
    %241 = arith.andi %239, %240 : vector<8x1xi32>
    %c16_i32_57 = arith.constant 16 : i32
    %242 = vector.broadcast %c16_i32_57 : i32 to vector<8x1xi32>
    %243 = arith.shrsi %239, %242 : vector<8x1xi32>
    %244 = vector.broadcast %241 : vector<8x1xi32> to vector<8x5xi32>
    %245 = arith.cmpi eq, %4, %244 : vector<8x5xi32>
    %246 = arith.extui %245 : vector<8x5xi1> to vector<8x5xi32>
    %247 = arith.sitofp %246 : vector<8x5xi32> to vector<8x5xf32>
    %248 = vector.broadcast %243 : vector<8x1xi32> to vector<8x5xi32>
    %249 = arith.cmpi eq, %4, %248 : vector<8x5xi32>
    %250 = arith.extui %249 : vector<8x5xi1> to vector<8x5xi32>
    %251 = arith.sitofp %250 : vector<8x5xi32> to vector<8x5xf32>
    %252 = vector.broadcast %236 : i32 to vector<8x1xi32>
    %253 = arith.cmpi slt, %252, %3 : vector<8x1xi32>
    %254 = arith.extui %253 : vector<8x1xi1> to vector<8x1xi32>
    %255 = arith.sitofp %254 : vector<8x1xi32> to vector<8x1xf32>
    %c1_i32_58 = arith.constant 1 : i32
    %256 = vector.broadcast %c1_i32_58 : i32 to vector<8x1xi32>
    %257 = arith.subi %3, %256 : vector<8x1xi32>
    %258 = vector.broadcast %236 : i32 to vector<8x1xi32>
    %259 = arith.cmpi eq, %258, %257 : vector<8x1xi32>
    %260 = arith.extui %259 : vector<8x1xi1> to vector<8x1xi32>
    %261 = arith.sitofp %260 : vector<8x1xi32> to vector<8x1xf32>
    %c0_i32_59 = arith.constant 0 : i32
    %262 = arith.cmpi eq, %236, %c0_i32_59 : i32
    %263 = arith.extui %262 : i1 to i32
    %264 = arith.sitofp %263 : i32 to f32
    %cst_60 = arith.constant dense<0.000000e+00> : vector<8x5xf32>
    %265 = tpu.matmul %251, %2, %cst_60 {dimension_numbers = #tpu.dot_dimension_numbers<[1], [0], [0], [1], [0, 0, 1, 1], [], []>} : vector<8x5xf32>, vector<5x5xf32>, vector<8x5xf32> -> vector<8x5xf32>
    %266 = vector.broadcast %255 : vector<8x1xf32> to vector<8x5xf32>
    %267 = arith.mulf %238, %266 : vector<8x5xf32>
    %268 = vector.broadcast %264 : f32 to vector<1x5xf32>
    %269 = arith.mulf %0, %268 : vector<1x5xf32>
    %270 = vector.broadcast %269 : vector<1x5xf32> to vector<8x5xf32>
    %271 = arith.addf %267, %270 : vector<8x5xf32>
    %cst_61 = arith.constant 1.000000e+00 : f32
    %272 = arith.subf %cst_61, %264 : f32
    %273 = vector.broadcast %272 : f32 to vector<8x1xf32>
    %274 = arith.mulf %255, %273 : vector<8x1xf32>
    %275 = vector.broadcast %274 : vector<8x1xf32> to vector<8x5xf32>
    %276 = arith.mulf %265, %275 : vector<8x5xf32>
    %277 = arith.addf %271, %276 : vector<8x5xf32>
    %278 = vector.broadcast %1 : vector<1x5xf32> to vector<8x5xf32>
    %279 = vector.broadcast %261 : vector<8x1xf32> to vector<8x5xf32>
    %280 = arith.mulf %278, %279 : vector<8x5xf32>
    %281 = arith.addf %277, %280 : vector<8x5xf32>
    %282 = arith.mulf %247, %281 : vector<8x5xf32>
    %cst_62 = arith.constant dense<0.000000e+00> : vector<8xf32>
    %283 = vector.multi_reduction <add>, %282, %cst_62 [1] : vector<8x5xf32> to vector<8xf32>
    %284 = vector.shape_cast %283 : vector<8xf32> to vector<8x1xf32>
    %285 = arith.addf %213, %284 : vector<8x1xf32>
    %cst_63 = arith.constant dense<0xFF800000> : vector<8xf32>
    %286 = vector.multi_reduction <maximumf>, %235, %cst_63 [1] : vector<8x5xf32> to vector<8xf32>
    %287 = vector.shape_cast %286 : vector<8xf32> to vector<8x1xf32>
    %288 = vector.broadcast %287 : vector<8x1xf32> to vector<8x5xf32>
    %289 = arith.subf %235, %288 : vector<8x5xf32>
    %290 = math.exp %289 : vector<8x5xf32>
    %cst_64 = arith.constant dense<0.000000e+00> : vector<8x5xf32>
    %291 = tpu.matmul %290, %11, %cst_64 {dimension_numbers = #tpu.dot_dimension_numbers<[1], [0], [0], [1], [0, 0, 1, 1], [], []>} : vector<8x5xf32>, vector<5x5xf32>, vector<8x5xf32> -> vector<8x5xf32>
    %292 = vector.broadcast %8 : f32 to vector<8x1xf32>
    %293 = arith.addf %287, %292 : vector<8x1xf32>
    %cst_65 = arith.constant 1.000000e-30 : f32
    %294 = vector.broadcast %cst_65 : f32 to vector<8x5xf32>
    %295 = arith.maximumf %291, %294 : vector<8x5xf32>
    %296 = math.log %295 : vector<8x5xf32>
    %297 = vector.broadcast %293 : vector<8x1xf32> to vector<8x5xf32>
    %298 = arith.addf %297, %296 : vector<8x5xf32>
    %299 = arith.addf %298, %238 : vector<8x5xf32>
    %c1_i32_66 = arith.constant 1 : i32
    %300 = arith.cmpi sge, %236, %c1_i32_66 : i32
    %301 = vector.broadcast %236 : i32 to vector<8x1xi32>
    %302 = arith.cmpi slt, %301, %3 : vector<8x1xi32>
    %303 = vector.broadcast %300 : i1 to vector<8x1xi1>
    %304 = arith.andi %303, %302 : vector<8x1xi1>
    %305 = vector.shape_cast %304 : vector<8x1xi1> to vector<8x1xi1>
    %306 = vector.broadcast %305 : vector<8x1xi1> to vector<8x5xi1>
    %307 = arith.select %306, %299, %235 : vector<8x5xi1>, vector<8x5xf32>
    %c4_i32 = arith.constant 4 : i32
    %308 = arith.addi %19, %c4_i32 : i32
    %c4 = arith.constant 4 : index
    %c0_67 = arith.constant 0 : index
    %c0_68 = arith.constant 0 : index
    %309 = vector.load %arg2[%c4, %c0_67, %c0_68] : memref<8x8x5xf32, #tpu.memory_space<vmem>>, vector<1x8x5xf32>
    %310 = vector.shape_cast %309 : vector<1x8x5xf32> to vector<8x5xf32>
    %311 = vector.extract_strided_slice %18 {offsets = [0, 4], sizes = [8, 1], strides = [1, 1]} : vector<8x8xi32> to vector<8x1xi32>
    %c65535_i32_69 = arith.constant 65535 : i32
    %312 = vector.broadcast %c65535_i32_69 : i32 to vector<8x1xi32>
    %313 = arith.andi %311, %312 : vector<8x1xi32>
    %c16_i32_70 = arith.constant 16 : i32
    %314 = vector.broadcast %c16_i32_70 : i32 to vector<8x1xi32>
    %315 = arith.shrsi %311, %314 : vector<8x1xi32>
    %316 = vector.broadcast %313 : vector<8x1xi32> to vector<8x5xi32>
    %317 = arith.cmpi eq, %4, %316 : vector<8x5xi32>
    %318 = arith.extui %317 : vector<8x5xi1> to vector<8x5xi32>
    %319 = arith.sitofp %318 : vector<8x5xi32> to vector<8x5xf32>
    %320 = vector.broadcast %315 : vector<8x1xi32> to vector<8x5xi32>
    %321 = arith.cmpi eq, %4, %320 : vector<8x5xi32>
    %322 = arith.extui %321 : vector<8x5xi1> to vector<8x5xi32>
    %323 = arith.sitofp %322 : vector<8x5xi32> to vector<8x5xf32>
    %324 = vector.broadcast %308 : i32 to vector<8x1xi32>
    %325 = arith.cmpi slt, %324, %3 : vector<8x1xi32>
    %326 = arith.extui %325 : vector<8x1xi1> to vector<8x1xi32>
    %327 = arith.sitofp %326 : vector<8x1xi32> to vector<8x1xf32>
    %c1_i32_71 = arith.constant 1 : i32
    %328 = vector.broadcast %c1_i32_71 : i32 to vector<8x1xi32>
    %329 = arith.subi %3, %328 : vector<8x1xi32>
    %330 = vector.broadcast %308 : i32 to vector<8x1xi32>
    %331 = arith.cmpi eq, %330, %329 : vector<8x1xi32>
    %332 = arith.extui %331 : vector<8x1xi1> to vector<8x1xi32>
    %333 = arith.sitofp %332 : vector<8x1xi32> to vector<8x1xf32>
    %c0_i32_72 = arith.constant 0 : i32
    %334 = arith.cmpi eq, %308, %c0_i32_72 : i32
    %335 = arith.extui %334 : i1 to i32
    %336 = arith.sitofp %335 : i32 to f32
    %cst_73 = arith.constant dense<0.000000e+00> : vector<8x5xf32>
    %337 = tpu.matmul %323, %2, %cst_73 {dimension_numbers = #tpu.dot_dimension_numbers<[1], [0], [0], [1], [0, 0, 1, 1], [], []>} : vector<8x5xf32>, vector<5x5xf32>, vector<8x5xf32> -> vector<8x5xf32>
    %338 = vector.broadcast %327 : vector<8x1xf32> to vector<8x5xf32>
    %339 = arith.mulf %310, %338 : vector<8x5xf32>
    %340 = vector.broadcast %336 : f32 to vector<1x5xf32>
    %341 = arith.mulf %0, %340 : vector<1x5xf32>
    %342 = vector.broadcast %341 : vector<1x5xf32> to vector<8x5xf32>
    %343 = arith.addf %339, %342 : vector<8x5xf32>
    %cst_74 = arith.constant 1.000000e+00 : f32
    %344 = arith.subf %cst_74, %336 : f32
    %345 = vector.broadcast %344 : f32 to vector<8x1xf32>
    %346 = arith.mulf %327, %345 : vector<8x1xf32>
    %347 = vector.broadcast %346 : vector<8x1xf32> to vector<8x5xf32>
    %348 = arith.mulf %337, %347 : vector<8x5xf32>
    %349 = arith.addf %343, %348 : vector<8x5xf32>
    %350 = vector.broadcast %1 : vector<1x5xf32> to vector<8x5xf32>
    %351 = vector.broadcast %333 : vector<8x1xf32> to vector<8x5xf32>
    %352 = arith.mulf %350, %351 : vector<8x5xf32>
    %353 = arith.addf %349, %352 : vector<8x5xf32>
    %354 = arith.mulf %319, %353 : vector<8x5xf32>
    %cst_75 = arith.constant dense<0.000000e+00> : vector<8xf32>
    %355 = vector.multi_reduction <add>, %354, %cst_75 [1] : vector<8x5xf32> to vector<8xf32>
    %356 = vector.shape_cast %355 : vector<8xf32> to vector<8x1xf32>
    %357 = arith.addf %285, %356 : vector<8x1xf32>
    %cst_76 = arith.constant dense<0xFF800000> : vector<8xf32>
    %358 = vector.multi_reduction <maximumf>, %307, %cst_76 [1] : vector<8x5xf32> to vector<8xf32>
    %359 = vector.shape_cast %358 : vector<8xf32> to vector<8x1xf32>
    %360 = vector.broadcast %359 : vector<8x1xf32> to vector<8x5xf32>
    %361 = arith.subf %307, %360 : vector<8x5xf32>
    %362 = math.exp %361 : vector<8x5xf32>
    %cst_77 = arith.constant dense<0.000000e+00> : vector<8x5xf32>
    %363 = tpu.matmul %362, %11, %cst_77 {dimension_numbers = #tpu.dot_dimension_numbers<[1], [0], [0], [1], [0, 0, 1, 1], [], []>} : vector<8x5xf32>, vector<5x5xf32>, vector<8x5xf32> -> vector<8x5xf32>
    %364 = vector.broadcast %8 : f32 to vector<8x1xf32>
    %365 = arith.addf %359, %364 : vector<8x1xf32>
    %cst_78 = arith.constant 1.000000e-30 : f32
    %366 = vector.broadcast %cst_78 : f32 to vector<8x5xf32>
    %367 = arith.maximumf %363, %366 : vector<8x5xf32>
    %368 = math.log %367 : vector<8x5xf32>
    %369 = vector.broadcast %365 : vector<8x1xf32> to vector<8x5xf32>
    %370 = arith.addf %369, %368 : vector<8x5xf32>
    %371 = arith.addf %370, %310 : vector<8x5xf32>
    %c1_i32_79 = arith.constant 1 : i32
    %372 = arith.cmpi sge, %308, %c1_i32_79 : i32
    %373 = vector.broadcast %308 : i32 to vector<8x1xi32>
    %374 = arith.cmpi slt, %373, %3 : vector<8x1xi32>
    %375 = vector.broadcast %372 : i1 to vector<8x1xi1>
    %376 = arith.andi %375, %374 : vector<8x1xi1>
    %377 = vector.shape_cast %376 : vector<8x1xi1> to vector<8x1xi1>
    %378 = vector.broadcast %377 : vector<8x1xi1> to vector<8x5xi1>
    %379 = arith.select %378, %371, %307 : vector<8x5xi1>, vector<8x5xf32>
    %c5_i32 = arith.constant 5 : i32
    %380 = arith.addi %19, %c5_i32 : i32
    %c5 = arith.constant 5 : index
    %c0_80 = arith.constant 0 : index
    %c0_81 = arith.constant 0 : index
    %381 = vector.load %arg2[%c5, %c0_80, %c0_81] : memref<8x8x5xf32, #tpu.memory_space<vmem>>, vector<1x8x5xf32>
    %382 = vector.shape_cast %381 : vector<1x8x5xf32> to vector<8x5xf32>
    %383 = vector.extract_strided_slice %18 {offsets = [0, 5], sizes = [8, 1], strides = [1, 1]} : vector<8x8xi32> to vector<8x1xi32>
    %c65535_i32_82 = arith.constant 65535 : i32
    %384 = vector.broadcast %c65535_i32_82 : i32 to vector<8x1xi32>
    %385 = arith.andi %383, %384 : vector<8x1xi32>
    %c16_i32_83 = arith.constant 16 : i32
    %386 = vector.broadcast %c16_i32_83 : i32 to vector<8x1xi32>
    %387 = arith.shrsi %383, %386 : vector<8x1xi32>
    %388 = vector.broadcast %385 : vector<8x1xi32> to vector<8x5xi32>
    %389 = arith.cmpi eq, %4, %388 : vector<8x5xi32>
    %390 = arith.extui %389 : vector<8x5xi1> to vector<8x5xi32>
    %391 = arith.sitofp %390 : vector<8x5xi32> to vector<8x5xf32>
    %392 = vector.broadcast %387 : vector<8x1xi32> to vector<8x5xi32>
    %393 = arith.cmpi eq, %4, %392 : vector<8x5xi32>
    %394 = arith.extui %393 : vector<8x5xi1> to vector<8x5xi32>
    %395 = arith.sitofp %394 : vector<8x5xi32> to vector<8x5xf32>
    %396 = vector.broadcast %380 : i32 to vector<8x1xi32>
    %397 = arith.cmpi slt, %396, %3 : vector<8x1xi32>
    %398 = arith.extui %397 : vector<8x1xi1> to vector<8x1xi32>
    %399 = arith.sitofp %398 : vector<8x1xi32> to vector<8x1xf32>
    %c1_i32_84 = arith.constant 1 : i32
    %400 = vector.broadcast %c1_i32_84 : i32 to vector<8x1xi32>
    %401 = arith.subi %3, %400 : vector<8x1xi32>
    %402 = vector.broadcast %380 : i32 to vector<8x1xi32>
    %403 = arith.cmpi eq, %402, %401 : vector<8x1xi32>
    %404 = arith.extui %403 : vector<8x1xi1> to vector<8x1xi32>
    %405 = arith.sitofp %404 : vector<8x1xi32> to vector<8x1xf32>
    %c0_i32_85 = arith.constant 0 : i32
    %406 = arith.cmpi eq, %380, %c0_i32_85 : i32
    %407 = arith.extui %406 : i1 to i32
    %408 = arith.sitofp %407 : i32 to f32
    %cst_86 = arith.constant dense<0.000000e+00> : vector<8x5xf32>
    %409 = tpu.matmul %395, %2, %cst_86 {dimension_numbers = #tpu.dot_dimension_numbers<[1], [0], [0], [1], [0, 0, 1, 1], [], []>} : vector<8x5xf32>, vector<5x5xf32>, vector<8x5xf32> -> vector<8x5xf32>
    %410 = vector.broadcast %399 : vector<8x1xf32> to vector<8x5xf32>
    %411 = arith.mulf %382, %410 : vector<8x5xf32>
    %412 = vector.broadcast %408 : f32 to vector<1x5xf32>
    %413 = arith.mulf %0, %412 : vector<1x5xf32>
    %414 = vector.broadcast %413 : vector<1x5xf32> to vector<8x5xf32>
    %415 = arith.addf %411, %414 : vector<8x5xf32>
    %cst_87 = arith.constant 1.000000e+00 : f32
    %416 = arith.subf %cst_87, %408 : f32
    %417 = vector.broadcast %416 : f32 to vector<8x1xf32>
    %418 = arith.mulf %399, %417 : vector<8x1xf32>
    %419 = vector.broadcast %418 : vector<8x1xf32> to vector<8x5xf32>
    %420 = arith.mulf %409, %419 : vector<8x5xf32>
    %421 = arith.addf %415, %420 : vector<8x5xf32>
    %422 = vector.broadcast %1 : vector<1x5xf32> to vector<8x5xf32>
    %423 = vector.broadcast %405 : vector<8x1xf32> to vector<8x5xf32>
    %424 = arith.mulf %422, %423 : vector<8x5xf32>
    %425 = arith.addf %421, %424 : vector<8x5xf32>
    %426 = arith.mulf %391, %425 : vector<8x5xf32>
    %cst_88 = arith.constant dense<0.000000e+00> : vector<8xf32>
    %427 = vector.multi_reduction <add>, %426, %cst_88 [1] : vector<8x5xf32> to vector<8xf32>
    %428 = vector.shape_cast %427 : vector<8xf32> to vector<8x1xf32>
    %429 = arith.addf %357, %428 : vector<8x1xf32>
    %cst_89 = arith.constant dense<0xFF800000> : vector<8xf32>
    %430 = vector.multi_reduction <maximumf>, %379, %cst_89 [1] : vector<8x5xf32> to vector<8xf32>
    %431 = vector.shape_cast %430 : vector<8xf32> to vector<8x1xf32>
    %432 = vector.broadcast %431 : vector<8x1xf32> to vector<8x5xf32>
    %433 = arith.subf %379, %432 : vector<8x5xf32>
    %434 = math.exp %433 : vector<8x5xf32>
    %cst_90 = arith.constant dense<0.000000e+00> : vector<8x5xf32>
    %435 = tpu.matmul %434, %11, %cst_90 {dimension_numbers = #tpu.dot_dimension_numbers<[1], [0], [0], [1], [0, 0, 1, 1], [], []>} : vector<8x5xf32>, vector<5x5xf32>, vector<8x5xf32> -> vector<8x5xf32>
    %436 = vector.broadcast %8 : f32 to vector<8x1xf32>
    %437 = arith.addf %431, %436 : vector<8x1xf32>
    %cst_91 = arith.constant 1.000000e-30 : f32
    %438 = vector.broadcast %cst_91 : f32 to vector<8x5xf32>
    %439 = arith.maximumf %435, %438 : vector<8x5xf32>
    %440 = math.log %439 : vector<8x5xf32>
    %441 = vector.broadcast %437 : vector<8x1xf32> to vector<8x5xf32>
    %442 = arith.addf %441, %440 : vector<8x5xf32>
    %443 = arith.addf %442, %382 : vector<8x5xf32>
    %c1_i32_92 = arith.constant 1 : i32
    %444 = arith.cmpi sge, %380, %c1_i32_92 : i32
    %445 = vector.broadcast %380 : i32 to vector<8x1xi32>
    %446 = arith.cmpi slt, %445, %3 : vector<8x1xi32>
    %447 = vector.broadcast %444 : i1 to vector<8x1xi1>
    %448 = arith.andi %447, %446 : vector<8x1xi1>
    %449 = vector.shape_cast %448 : vector<8x1xi1> to vector<8x1xi1>
    %450 = vector.broadcast %449 : vector<8x1xi1> to vector<8x5xi1>
    %451 = arith.select %450, %443, %379 : vector<8x5xi1>, vector<8x5xf32>
    %c6_i32 = arith.constant 6 : i32
    %452 = arith.addi %19, %c6_i32 : i32
    %c6 = arith.constant 6 : index
    %c0_93 = arith.constant 0 : index
    %c0_94 = arith.constant 0 : index
    %453 = vector.load %arg2[%c6, %c0_93, %c0_94] : memref<8x8x5xf32, #tpu.memory_space<vmem>>, vector<1x8x5xf32>
    %454 = vector.shape_cast %453 : vector<1x8x5xf32> to vector<8x5xf32>
    %455 = vector.extract_strided_slice %18 {offsets = [0, 6], sizes = [8, 1], strides = [1, 1]} : vector<8x8xi32> to vector<8x1xi32>
    %c65535_i32_95 = arith.constant 65535 : i32
    %456 = vector.broadcast %c65535_i32_95 : i32 to vector<8x1xi32>
    %457 = arith.andi %455, %456 : vector<8x1xi32>
    %c16_i32_96 = arith.constant 16 : i32
    %458 = vector.broadcast %c16_i32_96 : i32 to vector<8x1xi32>
    %459 = arith.shrsi %455, %458 : vector<8x1xi32>
    %460 = vector.broadcast %457 : vector<8x1xi32> to vector<8x5xi32>
    %461 = arith.cmpi eq, %4, %460 : vector<8x5xi32>
    %462 = arith.extui %461 : vector<8x5xi1> to vector<8x5xi32>
    %463 = arith.sitofp %462 : vector<8x5xi32> to vector<8x5xf32>
    %464 = vector.broadcast %459 : vector<8x1xi32> to vector<8x5xi32>
    %465 = arith.cmpi eq, %4, %464 : vector<8x5xi32>
    %466 = arith.extui %465 : vector<8x5xi1> to vector<8x5xi32>
    %467 = arith.sitofp %466 : vector<8x5xi32> to vector<8x5xf32>
    %468 = vector.broadcast %452 : i32 to vector<8x1xi32>
    %469 = arith.cmpi slt, %468, %3 : vector<8x1xi32>
    %470 = arith.extui %469 : vector<8x1xi1> to vector<8x1xi32>
    %471 = arith.sitofp %470 : vector<8x1xi32> to vector<8x1xf32>
    %c1_i32_97 = arith.constant 1 : i32
    %472 = vector.broadcast %c1_i32_97 : i32 to vector<8x1xi32>
    %473 = arith.subi %3, %472 : vector<8x1xi32>
    %474 = vector.broadcast %452 : i32 to vector<8x1xi32>
    %475 = arith.cmpi eq, %474, %473 : vector<8x1xi32>
    %476 = arith.extui %475 : vector<8x1xi1> to vector<8x1xi32>
    %477 = arith.sitofp %476 : vector<8x1xi32> to vector<8x1xf32>
    %c0_i32_98 = arith.constant 0 : i32
    %478 = arith.cmpi eq, %452, %c0_i32_98 : i32
    %479 = arith.extui %478 : i1 to i32
    %480 = arith.sitofp %479 : i32 to f32
    %cst_99 = arith.constant dense<0.000000e+00> : vector<8x5xf32>
    %481 = tpu.matmul %467, %2, %cst_99 {dimension_numbers = #tpu.dot_dimension_numbers<[1], [0], [0], [1], [0, 0, 1, 1], [], []>} : vector<8x5xf32>, vector<5x5xf32>, vector<8x5xf32> -> vector<8x5xf32>
    %482 = vector.broadcast %471 : vector<8x1xf32> to vector<8x5xf32>
    %483 = arith.mulf %454, %482 : vector<8x5xf32>
    %484 = vector.broadcast %480 : f32 to vector<1x5xf32>
    %485 = arith.mulf %0, %484 : vector<1x5xf32>
    %486 = vector.broadcast %485 : vector<1x5xf32> to vector<8x5xf32>
    %487 = arith.addf %483, %486 : vector<8x5xf32>
    %cst_100 = arith.constant 1.000000e+00 : f32
    %488 = arith.subf %cst_100, %480 : f32
    %489 = vector.broadcast %488 : f32 to vector<8x1xf32>
    %490 = arith.mulf %471, %489 : vector<8x1xf32>
    %491 = vector.broadcast %490 : vector<8x1xf32> to vector<8x5xf32>
    %492 = arith.mulf %481, %491 : vector<8x5xf32>
    %493 = arith.addf %487, %492 : vector<8x5xf32>
    %494 = vector.broadcast %1 : vector<1x5xf32> to vector<8x5xf32>
    %495 = vector.broadcast %477 : vector<8x1xf32> to vector<8x5xf32>
    %496 = arith.mulf %494, %495 : vector<8x5xf32>
    %497 = arith.addf %493, %496 : vector<8x5xf32>
    %498 = arith.mulf %463, %497 : vector<8x5xf32>
    %cst_101 = arith.constant dense<0.000000e+00> : vector<8xf32>
    %499 = vector.multi_reduction <add>, %498, %cst_101 [1] : vector<8x5xf32> to vector<8xf32>
    %500 = vector.shape_cast %499 : vector<8xf32> to vector<8x1xf32>
    %501 = arith.addf %429, %500 : vector<8x1xf32>
    %cst_102 = arith.constant dense<0xFF800000> : vector<8xf32>
    %502 = vector.multi_reduction <maximumf>, %451, %cst_102 [1] : vector<8x5xf32> to vector<8xf32>
    %503 = vector.shape_cast %502 : vector<8xf32> to vector<8x1xf32>
    %504 = vector.broadcast %503 : vector<8x1xf32> to vector<8x5xf32>
    %505 = arith.subf %451, %504 : vector<8x5xf32>
    %506 = math.exp %505 : vector<8x5xf32>
    %cst_103 = arith.constant dense<0.000000e+00> : vector<8x5xf32>
    %507 = tpu.matmul %506, %11, %cst_103 {dimension_numbers = #tpu.dot_dimension_numbers<[1], [0], [0], [1], [0, 0, 1, 1], [], []>} : vector<8x5xf32>, vector<5x5xf32>, vector<8x5xf32> -> vector<8x5xf32>
    %508 = vector.broadcast %8 : f32 to vector<8x1xf32>
    %509 = arith.addf %503, %508 : vector<8x1xf32>
    %cst_104 = arith.constant 1.000000e-30 : f32
    %510 = vector.broadcast %cst_104 : f32 to vector<8x5xf32>
    %511 = arith.maximumf %507, %510 : vector<8x5xf32>
    %512 = math.log %511 : vector<8x5xf32>
    %513 = vector.broadcast %509 : vector<8x1xf32> to vector<8x5xf32>
    %514 = arith.addf %513, %512 : vector<8x5xf32>
    %515 = arith.addf %514, %454 : vector<8x5xf32>
    %c1_i32_105 = arith.constant 1 : i32
    %516 = arith.cmpi sge, %452, %c1_i32_105 : i32
    %517 = vector.broadcast %452 : i32 to vector<8x1xi32>
    %518 = arith.cmpi slt, %517, %3 : vector<8x1xi32>
    %519 = vector.broadcast %516 : i1 to vector<8x1xi1>
    %520 = arith.andi %519, %518 : vector<8x1xi1>
    %521 = vector.shape_cast %520 : vector<8x1xi1> to vector<8x1xi1>
    %522 = vector.broadcast %521 : vector<8x1xi1> to vector<8x5xi1>
    %523 = arith.select %522, %515, %451 : vector<8x5xi1>, vector<8x5xf32>
    %c7_i32 = arith.constant 7 : i32
    %524 = arith.addi %19, %c7_i32 : i32
    %c7 = arith.constant 7 : index
    %c0_106 = arith.constant 0 : index
    %c0_107 = arith.constant 0 : index
    %525 = vector.load %arg2[%c7, %c0_106, %c0_107] : memref<8x8x5xf32, #tpu.memory_space<vmem>>, vector<1x8x5xf32>
    %526 = vector.shape_cast %525 : vector<1x8x5xf32> to vector<8x5xf32>
    %527 = vector.extract_strided_slice %18 {offsets = [0, 7], sizes = [8, 1], strides = [1, 1]} : vector<8x8xi32> to vector<8x1xi32>
    %c65535_i32_108 = arith.constant 65535 : i32
    %528 = vector.broadcast %c65535_i32_108 : i32 to vector<8x1xi32>
    %529 = arith.andi %527, %528 : vector<8x1xi32>
    %c16_i32_109 = arith.constant 16 : i32
    %530 = vector.broadcast %c16_i32_109 : i32 to vector<8x1xi32>
    %531 = arith.shrsi %527, %530 : vector<8x1xi32>
    %532 = vector.broadcast %529 : vector<8x1xi32> to vector<8x5xi32>
    %533 = arith.cmpi eq, %4, %532 : vector<8x5xi32>
    %534 = arith.extui %533 : vector<8x5xi1> to vector<8x5xi32>
    %535 = arith.sitofp %534 : vector<8x5xi32> to vector<8x5xf32>
    %536 = vector.broadcast %531 : vector<8x1xi32> to vector<8x5xi32>
    %537 = arith.cmpi eq, %4, %536 : vector<8x5xi32>
    %538 = arith.extui %537 : vector<8x5xi1> to vector<8x5xi32>
    %539 = arith.sitofp %538 : vector<8x5xi32> to vector<8x5xf32>
    %540 = vector.broadcast %524 : i32 to vector<8x1xi32>
    %541 = arith.cmpi slt, %540, %3 : vector<8x1xi32>
    %542 = arith.extui %541 : vector<8x1xi1> to vector<8x1xi32>
    %543 = arith.sitofp %542 : vector<8x1xi32> to vector<8x1xf32>
    %c1_i32_110 = arith.constant 1 : i32
    %544 = vector.broadcast %c1_i32_110 : i32 to vector<8x1xi32>
    %545 = arith.subi %3, %544 : vector<8x1xi32>
    %546 = vector.broadcast %524 : i32 to vector<8x1xi32>
    %547 = arith.cmpi eq, %546, %545 : vector<8x1xi32>
    %548 = arith.extui %547 : vector<8x1xi1> to vector<8x1xi32>
    %549 = arith.sitofp %548 : vector<8x1xi32> to vector<8x1xf32>
    %c0_i32_111 = arith.constant 0 : i32
    %550 = arith.cmpi eq, %524, %c0_i32_111 : i32
    %551 = arith.extui %550 : i1 to i32
    %552 = arith.sitofp %551 : i32 to f32
    %cst_112 = arith.constant dense<0.000000e+00> : vector<8x5xf32>
    %553 = tpu.matmul %539, %2, %cst_112 {dimension_numbers = #tpu.dot_dimension_numbers<[1], [0], [0], [1], [0, 0, 1, 1], [], []>} : vector<8x5xf32>, vector<5x5xf32>, vector<8x5xf32> -> vector<8x5xf32>
    %554 = vector.broadcast %543 : vector<8x1xf32> to vector<8x5xf32>
    %555 = arith.mulf %526, %554 : vector<8x5xf32>
    %556 = vector.broadcast %552 : f32 to vector<1x5xf32>
    %557 = arith.mulf %0, %556 : vector<1x5xf32>
    %558 = vector.broadcast %557 : vector<1x5xf32> to vector<8x5xf32>
    %559 = arith.addf %555, %558 : vector<8x5xf32>
    %cst_113 = arith.constant 1.000000e+00 : f32
    %560 = arith.subf %cst_113, %552 : f32
    %561 = vector.broadcast %560 : f32 to vector<8x1xf32>
    %562 = arith.mulf %543, %561 : vector<8x1xf32>
    %563 = vector.broadcast %562 : vector<8x1xf32> to vector<8x5xf32>
    %564 = arith.mulf %553, %563 : vector<8x5xf32>
    %565 = arith.addf %559, %564 : vector<8x5xf32>
    %566 = vector.broadcast %1 : vector<1x5xf32> to vector<8x5xf32>
    %567 = vector.broadcast %549 : vector<8x1xf32> to vector<8x5xf32>
    %568 = arith.mulf %566, %567 : vector<8x5xf32>
    %569 = arith.addf %565, %568 : vector<8x5xf32>
    %570 = arith.mulf %535, %569 : vector<8x5xf32>
    %cst_114 = arith.constant dense<0.000000e+00> : vector<8xf32>
    %571 = vector.multi_reduction <add>, %570, %cst_114 [1] : vector<8x5xf32> to vector<8xf32>
    %572 = vector.shape_cast %571 : vector<8xf32> to vector<8x1xf32>
    %573 = arith.addf %501, %572 : vector<8x1xf32>
    %cst_115 = arith.constant dense<0xFF800000> : vector<8xf32>
    %574 = vector.multi_reduction <maximumf>, %523, %cst_115 [1] : vector<8x5xf32> to vector<8xf32>
    %575 = vector.shape_cast %574 : vector<8xf32> to vector<8x1xf32>
    %576 = vector.broadcast %575 : vector<8x1xf32> to vector<8x5xf32>
    %577 = arith.subf %523, %576 : vector<8x5xf32>
    %578 = math.exp %577 : vector<8x5xf32>
    %cst_116 = arith.constant dense<0.000000e+00> : vector<8x5xf32>
    %579 = tpu.matmul %578, %11, %cst_116 {dimension_numbers = #tpu.dot_dimension_numbers<[1], [0], [0], [1], [0, 0, 1, 1], [], []>} : vector<8x5xf32>, vector<5x5xf32>, vector<8x5xf32> -> vector<8x5xf32>
    %580 = vector.broadcast %8 : f32 to vector<8x1xf32>
    %581 = arith.addf %575, %580 : vector<8x1xf32>
    %cst_117 = arith.constant 1.000000e-30 : f32
    %582 = vector.broadcast %cst_117 : f32 to vector<8x5xf32>
    %583 = arith.maximumf %579, %582 : vector<8x5xf32>
    %584 = math.log %583 : vector<8x5xf32>
    %585 = vector.broadcast %581 : vector<8x1xf32> to vector<8x5xf32>
    %586 = arith.addf %585, %584 : vector<8x5xf32>
    %587 = arith.addf %586, %526 : vector<8x5xf32>
    %c1_i32_118 = arith.constant 1 : i32
    %588 = arith.cmpi sge, %524, %c1_i32_118 : i32
    %589 = vector.broadcast %524 : i32 to vector<8x1xi32>
    %590 = arith.cmpi slt, %589, %3 : vector<8x1xi32>
    %591 = vector.broadcast %588 : i1 to vector<8x1xi1>
    %592 = arith.andi %591, %590 : vector<8x1xi1>
    %593 = vector.shape_cast %592 : vector<8x1xi1> to vector<8x1xi1>
    %594 = vector.broadcast %593 : vector<8x1xi1> to vector<8x5xi1>
    %595 = arith.select %594, %587, %523 : vector<8x5xi1>, vector<8x5xf32>
    %c0_119 = arith.constant 0 : index
    %c0_120 = arith.constant 0 : index
    %596 = vector.load %arg9[%c0_119, %c0_120] : memref<8x5xf32, #tpu.memory_space<vmem>>, vector<8x5xf32>
    tpu.vector_store %arg9[%c0_119, %c0_120], %595 {strides = array<i32>} : memref<8x5xf32, #tpu.memory_space<vmem>>, vector<8x5xf32>,
    %c0_121 = arith.constant 0 : index
    %c0_122 = arith.constant 0 : index
    %597 = vector.load %arg10[%c0_121, %c0_122] : memref<8x1xf32, #tpu.memory_space<vmem>>, vector<8x1xf32>
    tpu.vector_store %arg10[%c0_121, %c0_122], %573 {strides = array<i32>} : memref<8x1xf32, #tpu.memory_space<vmem>>, vector<8x1xf32>,
    %c0_i32_123 = arith.constant 0 : i32
    %598 = arith.cmpi eq, %arg1, %c0_i32_123 : i32
    %599 = arith.extui %598 : i1 to i32
    %c0_i32_124 = arith.constant 0 : i32
    %600 = arith.cmpi ne, %599, %c0_i32_124 : i32
    scf.if %600 {
      %601 = vector.broadcast %1 : vector<1x5xf32> to vector<8x5xf32>
      %602 = arith.addf %595, %601 : vector<8x5xf32>
      %cst_125 = arith.constant dense<0xFF800000> : vector<8xf32>
      %603 = vector.multi_reduction <maximumf>, %602, %cst_125 [1] : vector<8x5xf32> to vector<8xf32>
      %604 = vector.shape_cast %603 : vector<8xf32> to vector<8x1xf32>
      %605 = vector.broadcast %604 : vector<8x1xf32> to vector<8x5xf32>
      %606 = arith.subf %602, %605 : vector<8x5xf32>
      %607 = math.exp %606 : vector<8x5xf32>
      %cst_126 = arith.constant dense<0.000000e+00> : vector<8xf32>
      %608 = vector.multi_reduction <add>, %607, %cst_126 [1] : vector<8x5xf32> to vector<8xf32>
      %609 = vector.shape_cast %608 : vector<8xf32> to vector<8x1xf32>
      %610 = math.log %609 : vector<8x1xf32>
      %611 = arith.addf %604, %610 : vector<8x1xf32>
      %612 = arith.subf %573, %611 : vector<8x1xf32>
      %c0_127 = arith.constant 0 : index
      %c0_128 = arith.constant 0 : index
      %613 = vector.load %arg8[%c0_127, %c0_128] : memref<8x1xf32, #tpu.memory_space<vmem>>, vector<8x1xf32>
      tpu.vector_store %arg8[%c0_127, %c0_128], %612 {strides = array<i32>} : memref<8x1xf32, #tpu.memory_space<vmem>>, vector<8x1xf32>,
    } else {
    }
    return
  }
  func.func @transform_0(%arg0: i32, %arg1: i32) -> (i32, i32, i32) {
    %c0_i32 = arith.constant 0 : i32
    %c0_i32_0 = arith.constant 0 : i32
    return %arg1, %arg0, %c0_i32 : i32, i32, i32
  }
  func.func @transform_1(%arg0: i32, %arg1: i32) -> (i32, i32, i32) {
    %c0_i32 = arith.constant 0 : i32
    %c0_i32_0 = arith.constant 0 : i32
    return %arg1, %arg0, %c0_i32 : i32, i32, i32
  }
  func.func @transform_2(%arg0: i32, %arg1: i32) -> (i32, i32) {
    %c0_i32 = arith.constant 0 : i32
    %c0_i32_0 = arith.constant 0 : i32
    return %arg0, %c0_i32 : i32, i32
  }
  func.func @transform_3(%arg0: i32, %arg1: i32) -> (i32, i32) {
    %c0_i32 = arith.constant 0 : i32
    %c0_i32_0 = arith.constant 0 : i32
    %c0_i32_1 = arith.constant 0 : i32
    return %c0_i32, %c0_i32_0 : i32, i32
  }
  func.func @transform_4(%arg0: i32, %arg1: i32) -> (i32, i32) {
    %c0_i32 = arith.constant 0 : i32
    %c0_i32_0 = arith.constant 0 : i32
    %c0_i32_1 = arith.constant 0 : i32
    return %c0_i32, %c0_i32_0 : i32, i32
  }
  func.func @transform_5(%arg0: i32, %arg1: i32) -> (i32, i32) {
    %c0_i32 = arith.constant 0 : i32
    %c0_i32_0 = arith.constant 0 : i32
    %c0_i32_1 = arith.constant 0 : i32
    return %c0_i32, %c0_i32_0 : i32, i32
  }
  func.func @transform_6(%arg0: i32, %arg1: i32) -> (i32, i32) {
    %c0_i32 = arith.constant 0 : i32
    %c0_i32_0 = arith.constant 0 : i32
    return %arg0, %c0_i32 : i32, i32
  }
}

</mosaic_0001>

<llo_original>
// kernel: tpu_custom_call.1
$region0: #{tpu_custom_call.1}
  #allocation0 [shape = 'u32[]', space=smem, size = 0x4, offset = 0x4, fixed_abs, tag = 'smem constant byte address 0x4 - core index']
  #allocation1 [shape = 'u32[72,128]{1,0:T(1,128)}', space=vmem, size = 0x9000, scoped, tag = 'internal scratch']
  #allocation2 [shape = 'f32[8,5]{1,0:T(8,128)}', space=vmem, size = 0x1000, scoped, tag = 'scratch operand']
  #allocation3 [shape = 'f32[8,1]{1,0:T(8,128)}', space=vmem, size = 0x1000, scoped, tag = 'scratch operand']
  %s0 = inlined_call_operand.vmem [shape: f32[8,8,5], index: 0, kind: input, shape index: {}]
  %s1 = inlined_call_operand.vmem [shape: s32[1,8,8], index: 1, kind: input, shape index: {}]
  %s2 = inlined_call_operand.vmem [shape: s32[8,1], index: 2, kind: input, shape index: {}]
  %s3 = inlined_call_operand.vmem [shape: f32[1,5], index: 3, kind: input, shape index: {}]
  %s4 = inlined_call_operand.vmem [shape: f32[5,5], index: 4, kind: input, shape index: {}]
  %s5 = inlined_call_operand.vmem [shape: f32[1,5], index: 5, kind: input, shape index: {}]
  %s6 = inlined_call_operand.vmem [shape: f32[8,1], index: 6, kind: output, shape index: {}]
  %s7 = sld [smem:[#allocation0]]
  $region42: #{tpu_custom_call.1} parent=0
    _
  %s9 = ssub.s32 1, %s7
  %s10 = scalar_select 0, %s9, %s7
  // Predicated region
  $region2: #{tpu_custom_call.1} parent=0 // pred_check
    _
  $region3: #{tpu_custom_call.1} parent=0 // pred_check_branch
    %12 = sbr.rel (0) target = $region5
  $region4: #{tpu_custom_call.1} parent=0 // pred_region
    _
  $region5: #{tpu_custom_call.1} parent=0 // pred_fallthru
    _
  // Predicated region
  $region6: #{tpu_custom_call.1} parent=0 // pred_check
    _
  $region7: #{tpu_custom_call.1} parent=0 // pred_check_branch
    %14 = sbr.rel (0) target = $region9
  $region8: #{tpu_custom_call.1} parent=0 // pred_region
    _
  $region9: #{tpu_custom_call.1} parent=0 // pred_fallthru
    _
  // Predicated region
  $region10: #{tpu_custom_call.1} parent=0 // pred_check
    _
  $region11: #{tpu_custom_call.1} parent=0 // pred_check_branch
    %16 = sbr.rel (0) target = $region13
  $region12: #{tpu_custom_call.1} parent=0 // pred_region
    _
  $region13: #{tpu_custom_call.1} parent=0 // pred_fallthru
    _
  // Predicated region
  $region14: #{tpu_custom_call.1} parent=0 // pred_check
    _
  $region15: #{tpu_custom_call.1} parent=0 // pred_check_branch
    %18 = sbr.rel (0) target = $region17
  $region16: #{tpu_custom_call.1} parent=0 // pred_region
    _
  $region17: #{tpu_custom_call.1} parent=0 // pred_fallthru
    _
  // Predicated region
  $region18: #{tpu_custom_call.1} parent=0 // pred_check
    _
  $region19: #{tpu_custom_call.1} parent=0 // pred_check_branch
    %20 = sbr.rel (0) target = $region21
  $region20: #{tpu_custom_call.1} parent=0 // pred_region
    _
  $region21: #{tpu_custom_call.1} parent=0 // pred_fallthru
    _
  // Predicated region
  $region22: #{tpu_custom_call.1} parent=0 // pred_check
    _
  $region23: #{tpu_custom_call.1} parent=0 // pred_check_branch
    %22 = sbr.rel (0) target = $region25
  $region24: #{tpu_custom_call.1} parent=0 // pred_region
    _
  $region25: #{tpu_custom_call.1} parent=0 // pred_fallthru
    _
  %v23 = vld [vmem:[%s3] sm:$0x1]
  %v24 = vld [vmem:[%s5] sm:$0x1]
  %v25 = vld [vmem:[%s4] sm:$0x1f]
  %v26 = vld [vmem:[%s2] sm:$0xff]
  %v27 = vlaneseq
  %v28 = vand.u32 %v27, 127
  %vm29 = vcmask 36864
  %v30 = vsel %vm29, %v25, -inf
  %31 = vmax.xlane.f32.xlu0 %v30
  %v32 = vpop.xlane.xlu0 %31
  %v33 = vrot.slane %v32, 4
  %v34 = vmax.f32 %v32, %v33
  %v35 = vrot.slane %v34, 2
  %v36 = vmax.f32 %v34, %v35
  %v37 = vrot.slane %v36, 1
  %v38 = vmax.f32 %v36, %v37
  %s39 = vtos %v38
  %v40 = vstv %s39
  %v41 = vsub.f32 %v25, %v40
  %v42 = vmul.f32 %v41, 1.442695
  %v43 = vpow.pop %v42
  %p44 = scmp.eq.s32.totalorder 0, 0
  // Predicated region
  $region26: #{tpu_custom_call.1} parent=0 // pred_check
    %p45 = pneg %p44
  $region27: #{tpu_custom_call.1} parent=0 // pred_check_branch
    %47 = sbr.rel (%p45) target = $region29
  $region28: #{tpu_custom_call.1} parent=0 // pred_region
    %v48 = vld [vmem:[%s0] sm:$0xff]
    %v50 = vperm.slane %v23, 0
    %v52 = vadd.f32 %v50, %v48
    %vm53 = vcmask 39936
    %54 = vst.msk [vmem:[#allocation2] sm:$0xff] %vm53, %v52
    %vm55 = vcmask 7168
    %56 = vst.msk [vmem:[#allocation3] sm:$0xff] %vm55, 0.0
  $region29: #{tpu_custom_call.1} parent=0 // pred_fallthru
    _
  %v57 = vld [vmem:[#allocation2] sm:$0xff]
  %v58 = vld [vmem:[#allocation3] sm:$0xff]
  %v59 = vld [vmem:[%s1] sm:$0xff]
  %s60 = smul.u32 0, 8
  %v61 = vld [vmem:[%s0] sm:$0xff]
  %v62 = vand.u32 %v59, 65535
  %v63 = vshra.s32 %v59, 16
  %64 = vset.pattern.permute.xlu0 0
  %65 = vperm.xlu0 %64, %v62
  %v66 = vpop.permute.xlu0 %65
  %vm67 = vcmp.eq.s32.totalorder %v28, %v66
  %v68 = vsel %vm67, 1, 0
  %v69 = vcvt.s32.f32 %v68
  %70 = vset.pattern.permute.xlu0 0
  %71 = vperm.xlu0 %70, %v63
  %v72 = vpop.permute.xlu0 %71
  %vm73 = vcmp.eq.s32.totalorder %v28, %v72
  %v74 = vsel %vm73, 1, 0
  %v75 = vcvt.s32.f32 %v74
  %v76 = vstv %s60
  %vm77 = vcmp.lt.s32.totalorder %v76, %v26
  %v78 = vsel %vm77, 1, 0
  %v79 = vcvt.s32.f32 %v78
  %v80 = vsub.s32 %v26, 1
  %vm81 = vcmp.eq.s32.totalorder %v76, %v80
  %v82 = vsel %vm81, 1, 0
  %v83 = vcvt.s32.f32 %v82
  %p84 = scmp.eq.s32.totalorder %s60, 0
  %s85 = scalar_select %p84, 1, 0
  %s86 = scvt.s32.f32 %s85
  %vm87 = vcmask 39936
  %v89 = vsel %vm87, %v75, 0
  %vm91 = vcmask 1044480
  %v93 = vsel %vm91, %v25, 0
  %95 = vmatpush.msra.mxu0 0.0
  %96 = vmatpush.msra.mxu0 0.0
  %97 = vmatpush.msra.mxu0 0.0
  %98 = vmatpush.msra.mxu0 0.0
  %99 = vmatpush.msra.mxu0 0.0
  %100 = vmatpush.msra.mxu0 0.0
  %101 = vmatpush.msra.mxu0 0.0
  %102 = vmatpush.msra.mxu0 0.0
  %103 = vmatpush.msra.mxu0 0.0
  %104 = vmatpush.msra.mxu0 0.0
  %105 = vmatpush.msra.mxu0 0.0
  %106 = vmatpush.msra.mxu0 0.0
  %107 = vmatpush.msra.mxu0 0.0
  %108 = vmatpush.msra.mxu0 0.0
  %109 = vmatpush.msra.mxu0 0.0
  %110 = vmatpush.msra.mxu0 %v93
  %111 = vmatmul.f32.gmra.mxu0 %v89
  %v112 = vpop.f32.mrf.mxu0
  %v113 = vadd.f32 0.0, %v112
  %114 = vdwg.mxu0
  %116 = vset.pattern.permute.xlu0 0
  %117 = vperm.xlu0 %116, %v79
  %v118 = vpop.permute.xlu0 %117
  %v120 = vmul.f32 %v61, %v118
  %v121 = vstv %s86
  %v122 = vmul.f32 %v23, %v121
  %v124 = vperm.slane %v122, 0
  %v126 = vadd.f32 %v120, %v124
  %s127 = ssub.f32 1.0, %s86
  %v128 = vstv %s127
  %v129 = vmul.f32 %v79, %v128
  %131 = vset.pattern.permute.xlu0 0
  %132 = vperm.xlu0 %131, %v129
  %v133 = vpop.permute.xlu0 %132
  %v135 = vmul.f32 %v113, %v133
  %v136 = vadd.f32 %v126, %v135
  %v138 = vperm.slane %v24, 0
  %141 = vset.pattern.permute.xlu0 0
  %142 = vperm.xlu0 %141, %v83
  %v143 = vpop.permute.xlu0 %142
  %v145 = vmul.f32 %v138, %v143
  %v146 = vadd.f32 %v136, %v145
  %v147 = vmul.f32 %v69, %v146
  %v148 = vsel %vm87, %v147, 0.0
  %149 = vadd.xlane.f32.xlu0 %v148
  %v150 = vpop.xlane.xlu0 %149
  %v151 = vadd.f32 %v58, %v150
  %v152 = vsel %vm87, %v57, -inf
  %153 = vmax.xlane.f32.xlu0 %v152
  %v154 = vpop.xlane.xlu0 %153
  %v155 = vsub.f32 %v57, %v154
  %v156 = vmul.f32 %v155, 1.442695
  %v157 = vpow.pop %v156
  %v159 = vsel %vm87, %v157, 0
  %v162 = vsel %vm91, %v43, 0
  %164 = vmatpush.msra.mxu0 0.0
  %165 = vmatpush.msra.mxu0 0.0
  %166 = vmatpush.msra.mxu0 0.0
  %167 = vmatpush.msra.mxu0 0.0
  %168 = vmatpush.msra.mxu0 0.0
  %169 = vmatpush.msra.mxu0 0.0
  %170 = vmatpush.msra.mxu0 0.0
  %171 = vmatpush.msra.mxu0 0.0
  %172 = vmatpush.msra.mxu0 0.0
  %173 = vmatpush.msra.mxu0 0.0
  %174 = vmatpush.msra.mxu0 0.0
  %175 = vmatpush.msra.mxu0 0.0
  %176 = vmatpush.msra.mxu0 0.0
  %177 = vmatpush.msra.mxu0 0.0
  %178 = vmatpush.msra.mxu0 0.0
  %179 = vmatpush.msra.mxu0 %v162
  %180 = vmatmul.f32.gmra.mxu0 %v159
  %v181 = vpop.f32.mrf.mxu0
  %v182 = vadd.f32 0.0, %v181
  %183 = vdwg.mxu0
  %v184 = vadd.f32 %v154, %v40
  %v185 = vmax.f32 %v182, 1e-30
  %v186 = vlog2.pop %v185
  %v187 = vmul.f32 %v186, 0.6931472
  %v188 = vadd.f32 %v184, %v187
  %v189 = vadd.f32 %v188, %v61
  %p190 = scmp.ge.s32.totalorder %s60, 1
  %s191 = scalar_select %p190, 1, 0
  %v192 = vstv %s191
  %vm193 = vcmp.eq.s32.totalorder %v192, 1
  %vm194 = vmand %vm193, %vm77
  %v195 = vsel %vm194, 1, 0
  %196 = vset.pattern.permute.xlu0 0
  %197 = vperm.xlu0 %196, %v195
  %v198 = vpop.permute.xlu0 %197
  %vm199 = vcmp.eq.s32.totalorder %v198, 1
  %v200 = vsel %vm199, %v189, %v57
  %s201 = sadd.s32 %s60, 1
  %s202 = scalar_lea.vmem %s0, 8
  %v203 = vld [vmem:[%s202] sm:$0xff]
  %204 = vset.pattern.permute.xlu0 1
  %205 = vperm.xlu0 %204, %v62
  %v206 = vpop.permute.xlu0 %205
  %vm207 = vcmp.eq.s32.totalorder %v28, %v206
  %v208 = vsel %vm207, 1, 0
  %v209 = vcvt.s32.f32 %v208
  %210 = vset.pattern.permute.xlu0 1
  %211 = vperm.xlu0 %210, %v63
  %v212 = vpop.permute.xlu0 %211
  %vm213 = vcmp.eq.s32.totalorder %v28, %v212
  %v214 = vsel %vm213, 1, 0
  %v215 = vcvt.s32.f32 %v214
  %v216 = vstv %s201
  %vm217 = vcmp.lt.s32.totalorder %v216, %v26
  %v218 = vsel %vm217, 1, 0
  %v219 = vcvt.s32.f32 %v218
  %vm220 = vcmp.eq.s32.totalorder %v216, %v80
  %v221 = vsel %vm220, 1, 0
  %v222 = vcvt.s32.f32 %v221
  %p223 = scmp.eq.s32.totalorder %s201, 0
  %s224 = scalar_select %p223, 1, 0
  %s225 = scvt.s32.f32 %s224
  %v227 = vsel %vm87, %v215, 0
  %229 = vmatpush.msra.mxu0 0.0
  %230 = vmatpush.msra.mxu0 0.0
  %231 = vmatpush.msra.mxu0 0.0
  %232 = vmatpush.msra.mxu0 0.0
  %233 = vmatpush.msra.mxu0 0.0
  %234 = vmatpush.msra.mxu0 0.0
  %235 = vmatpush.msra.mxu0 0.0
  %236 = vmatpush.msra.mxu0 0.0
  %237 = vmatpush.msra.mxu0 0.0
  %238 = vmatpush.msra.mxu0 0.0
  %239 = vmatpush.msra.mxu0 0.0
  %240 = vmatpush.msra.mxu0 0.0
  %241 = vmatpush.msra.mxu0 0.0
  %242 = vmatpush.msra.mxu0 0.0
  %243 = vmatpush.msra.mxu0 0.0
  %244 = vmatpush.msra.mxu0 %v93
  %245 = vmatmul.f32.gmra.mxu0 %v227
  %v246 = vpop.f32.mrf.mxu0
  %v247 = vadd.f32 0.0, %v246
  %248 = vdwg.mxu0
  %250 = vset.pattern.permute.xlu0 0
  %251 = vperm.xlu0 %250, %v219
  %v252 = vpop.permute.xlu0 %251
  %v254 = vmul.f32 %v203, %v252
  %v255 = vstv %s225
  %v256 = vmul.f32 %v23, %v255
  %v258 = vperm.slane %v256, 0
  %v260 = vadd.f32 %v254, %v258
  %s261 = ssub.f32 1.0, %s225
  %v262 = vstv %s261
  %v263 = vmul.f32 %v219, %v262
  %265 = vset.pattern.permute.xlu0 0
  %266 = vperm.xlu0 %265, %v263
  %v267 = vpop.permute.xlu0 %266
  %v269 = vmul.f32 %v247, %v267
  %v270 = vadd.f32 %v260, %v269
  %272 = vset.pattern.permute.xlu0 0
  %273 = vperm.xlu0 %272, %v222
  %v274 = vpop.permute.xlu0 %273
  %v276 = vmul.f32 %v138, %v274
  %v277 = vadd.f32 %v270, %v276
  %v278 = vmul.f32 %v209, %v277
  %v279 = vsel %vm87, %v278, 0.0
  %280 = vadd.xlane.f32.xlu0 %v279
  %v281 = vpop.xlane.xlu0 %280
  %v282 = vadd.f32 %v151, %v281
  %v283 = vsel %vm87, %v200, -inf
  %284 = vmax.xlane.f32.xlu0 %v283
  %v285 = vpop.xlane.xlu0 %284
  %v286 = vsub.f32 %v200, %v285
  %v287 = vmul.f32 %v286, 1.442695
  %v288 = vpow.pop %v287
  %v290 = vsel %vm87, %v288, 0
  %292 = vmatpush.msra.mxu0 0.0
  %293 = vmatpush.msra.mxu0 0.0
  %294 = vmatpush.msra.mxu0 0.0
  %295 = vmatpush.msra.mxu0 0.0
  %296 = vmatpush.msra.mxu0 0.0
  %297 = vmatpush.msra.mxu0 0.0
  %298 = vmatpush.msra.mxu0 0.0
  %299 = vmatpush.msra.mxu0 0.0
  %300 = vmatpush.msra.mxu0 0.0
  %301 = vmatpush.msra.mxu0 0.0
  %302 = vmatpush.msra.mxu0 0.0
  %303 = vmatpush.msra.mxu0 0.0
  %304 = vmatpush.msra.mxu0 0.0
  %305 = vmatpush.msra.mxu0 0.0
  %306 = vmatpush.msra.mxu0 0.0
  %307 = vmatpush.msra.mxu0 %v162
  %308 = vmatmul.f32.gmra.mxu0 %v290
  %v309 = vpop.f32.mrf.mxu0
  %v310 = vadd.f32 0.0, %v309
  %311 = vdwg.mxu0
  %v312 = vadd.f32 %v285, %v40
  %v313 = vmax.f32 %v310, 1e-30
  %v314 = vlog2.pop %v313
  %v315 = vmul.f32 %v314, 0.6931472
  %v316 = vadd.f32 %v312, %v315
  %v317 = vadd.f32 %v316, %v203
  %p318 = scmp.ge.s32.totalorder %s201, 1
  %s319 = scalar_select %p318, 1, 0
  %v320 = vstv %s319
  %vm321 = vcmp.eq.s32.totalorder %v320, 1
  %vm322 = vmand %vm321, %vm217
  %v323 = vsel %vm322, 1, 0
  %324 = vset.pattern.permute.xlu0 0
  %325 = vperm.xlu0 %324, %v323
  %v326 = vpop.permute.xlu0 %325
  %vm327 = vcmp.eq.s32.totalorder %v326, 1
  %v328 = vsel %vm327, %v317, %v200
  %s329 = sadd.s32 %s60, 2
  %s330 = scalar_lea.vmem %s0, 16
  %v331 = vld [vmem:[%s330] sm:$0xff]
  %332 = vset.pattern.permute.xlu0 2
  %333 = vperm.xlu0 %332, %v62
  %v334 = vpop.permute.xlu0 %333
  %vm335 = vcmp.eq.s32.totalorder %v28, %v334
  %v336 = vsel %vm335, 1, 0
  %v337 = vcvt.s32.f32 %v336
  %338 = vset.pattern.permute.xlu0 2
  %339 = vperm.xlu0 %338, %v63
  %v340 = vpop.permute.xlu0 %339
  %vm341 = vcmp.eq.s32.totalorder %v28, %v340
  %v342 = vsel %vm341, 1, 0
  %v343 = vcvt.s32.f32 %v342
  %v344 = vstv %s329
  %vm345 = vcmp.lt.s32.totalorder %v344, %v26
  %v346 = vsel %vm345, 1, 0
  %v347 = vcvt.s32.f32 %v346
  %vm348 = vcmp.eq.s32.totalorder %v344, %v80
  %v349 = vsel %vm348, 1, 0
  %v350 = vcvt.s32.f32 %v349
  %p351 = scmp.eq.s32.totalorder %s329, 0
  %s352 = scalar_select %p351, 1, 0
  %s353 = scvt.s32.f32 %s352
  %v355 = vsel %vm87, %v343, 0
  %357 = vmatpush.msra.mxu0 0.0
  %358 = vmatpush.msra.mxu0 0.0
  %359 = vmatpush.msra.mxu0 0.0
  %360 = vmatpush.msra.mxu0 0.0
  %361 = vmatpush.msra.mxu0 0.0
  %362 = vmatpush.msra.mxu0 0.0
  %363 = vmatpush.msra.mxu0 0.0
  %364 = vmatpush.msra.mxu0 0.0
  %365 = vmatpush.msra.mxu0 0.0
  %366 = vmatpush.msra.mxu0 0.0
  %367 = vmatpush.msra.mxu0 0.0
  %368 = vmatpush.msra.mxu0 0.0
  %369 = vmatpush.msra.mxu0 0.0
  %370 = vmatpush.msra.mxu0 0.0
  %371 = vmatpush.msra.mxu0 0.0
  %372 = vmatpush.msra.mxu0 %v93
  %373 = vmatmul.f32.gmra.mxu0 %v355
  %v374 = vpop.f32.mrf.mxu0
  %v375 = vadd.f32 0.0, %v374
  %376 = vdwg.mxu0
  %378 = vset.pattern.permute.xlu0 0
  %379 = vperm.xlu0 %378, %v347
  %v380 = vpop.permute.xlu0 %379
  %v382 = vmul.f32 %v331, %v380
  %v383 = vstv %s353
  %v384 = vmul.f32 %v23, %v383
  %v386 = vperm.slane %v384, 0
  %v388 = vadd.f32 %v382, %v386
  %s389 = ssub.f32 1.0, %s353
  %v390 = vstv %s389
  %v391 = vmul.f32 %v347, %v390
  %393 = vset.pattern.permute.xlu0 0
  %394 = vperm.xlu0 %393, %v391
  %v395 = vpop.permute.xlu0 %394
  %v397 = vmul.f32 %v375, %v395
  %v398 = vadd.f32 %v388, %v397
  %400 = vset.pattern.permute.xlu0 0
  %401 = vperm.xlu0 %400, %v350
  %v402 = vpop.permute.xlu0 %401
  %v404 = vmul.f32 %v138, %v402
  %v405 = vadd.f32 %v398, %v404
  %v406 = vmul.f32 %v337, %v405
  %v407 = vsel %vm87, %v406, 0.0
  %408 = vadd.xlane.f32.xlu0 %v407
  %v409 = vpop.xlane.xlu0 %408
  %v410 = vadd.f32 %v282, %v409
  %v411 = vsel %vm87, %v328, -inf
  %412 = vmax.xlane.f32.xlu0 %v411
  %v413 = vpop.xlane.xlu0 %412
  %v414 = vsub.f32 %v328, %v413
  %v415 = vmul.f32 %v414, 1.442695
  %v416 = vpow.pop %v415
  %v418 = vsel %vm87, %v416, 0
  %420 = vmatpush.msra.mxu0 0.0
  %421 = vmatpush.msra.mxu0 0.0
  %422 = vmatpush.msra.mxu0 0.0
  %423 = vmatpush.msra.mxu0 0.0
  %424 = vmatpush.msra.mxu0 0.0
  %425 = vmatpush.msra.mxu0 0.0
  %426 = vmatpush.msra.mxu0 0.0
  %427 = vmatpush.msra.mxu0 0.0
  %428 = vmatpush.msra.mxu0 0.0
  %429 = vmatpush.msra.mxu0 0.0
  %430 = vmatpush.msra.mxu0 0.0
  %431 = vmatpush.msra.mxu0 0.0
  %432 = vmatpush.msra.mxu0 0.0
  %433 = vmatpush.msra.mxu0 0.0
  %434 = vmatpush.msra.mxu0 0.0
  %435 = vmatpush.msra.mxu0 %v162
  %436 = vmatmul.f32.gmra.mxu0 %v418
  %v437 = vpop.f32.mrf.mxu0
  %v438 = vadd.f32 0.0, %v437
  %439 = vdwg.mxu0
  %v440 = vadd.f32 %v413, %v40
  %v441 = vmax.f32 %v438, 1e-30
  %v442 = vlog2.pop %v441
  %v443 = vmul.f32 %v442, 0.6931472
  %v444 = vadd.f32 %v440, %v443
  %v445 = vadd.f32 %v444, %v331
  %p446 = scmp.ge.s32.totalorder %s329, 1
  %s447 = scalar_select %p446, 1, 0
  %v448 = vstv %s447
  %vm449 = vcmp.eq.s32.totalorder %v448, 1
  %vm450 = vmand %vm449, %vm345
  %v451 = vsel %vm450, 1, 0
  %452 = vset.pattern.permute.xlu0 0
  %453 = vperm.xlu0 %452, %v451
  %v454 = vpop.permute.xlu0 %453
  %vm455 = vcmp.eq.s32.totalorder %v454, 1
  %v456 = vsel %vm455, %v445, %v328
  %s457 = sadd.s32 %s60, 3
  %s458 = scalar_lea.vmem %s0, 24
  %v459 = vld [vmem:[%s458] sm:$0xff]
  %460 = vset.pattern.permute.xlu0 3
  %461 = vperm.xlu0 %460, %v62
  %v462 = vpop.permute.xlu0 %461
  %vm463 = vcmp.eq.s32.totalorder %v28, %v462
  %v464 = vsel %vm463, 1, 0
  %v465 = vcvt.s32.f32 %v464
  %466 = vset.pattern.permute.xlu0 3
  %467 = vperm.xlu0 %466, %v63
  %v468 = vpop.permute.xlu0 %467
  %vm469 = vcmp.eq.s32.totalorder %v28, %v468
  %v470 = vsel %vm469, 1, 0
  %v471 = vcvt.s32.f32 %v470
  %v472 = vstv %s457
  %vm473 = vcmp.lt.s32.totalorder %v472, %v26
  %v474 = vsel %vm473, 1, 0
  %v475 = vcvt.s32.f32 %v474
  %vm476 = vcmp.eq.s32.totalorder %v472, %v80
  %v477 = vsel %vm476, 1, 0
  %v478 = vcvt.s32.f32 %v477
  %p479 = scmp.eq.s32.totalorder %s457, 0
  %s480 = scalar_select %p479, 1, 0
  %s481 = scvt.s32.f32 %s480
  %v483 = vsel %vm87, %v471, 0
  %485 = vmatpush.msra.mxu0 0.0
  %486 = vmatpush.msra.mxu0 0.0
  %487 = vmatpush.msra.mxu0 0.0
  %488 = vmatpush.msra.mxu0 0.0
  %489 = vmatpush.msra.mxu0 0.0
  %490 = vmatpush.msra.mxu0 0.0
  %491 = vmatpush.msra.mxu0 0.0
  %492 = vmatpush.msra.mxu0 0.0
  %493 = vmatpush.msra.mxu0 0.0
  %494 = vmatpush.msra.mxu0 0.0
  %495 = vmatpush.msra.mxu0 0.0
  %496 = vmatpush.msra.mxu0 0.0
  %497 = vmatpush.msra.mxu0 0.0
  %498 = vmatpush.msra.mxu0 0.0
  %499 = vmatpush.msra.mxu0 0.0
  %500 = vmatpush.msra.mxu0 %v93
  %501 = vmatmul.f32.gmra.mxu0 %v483
  %v502 = vpop.f32.mrf.mxu0
  %v503 = vadd.f32 0.0, %v502
  %504 = vdwg.mxu0
  %506 = vset.pattern.permute.xlu0 0
  %507 = vperm.xlu0 %506, %v475
  %v508 = vpop.permute.xlu0 %507
  %v510 = vmul.f32 %v459, %v508
  %v511 = vstv %s481
  %v512 = vmul.f32 %v23, %v511
  %v514 = vperm.slane %v512, 0
  %v516 = vadd.f32 %v510, %v514
  %s517 = ssub.f32 1.0, %s481
  %v518 = vstv %s517
  %v519 = vmul.f32 %v475, %v518
  %521 = vset.pattern.permute.xlu0 0
  %522 = vperm.xlu0 %521, %v519
  %v523 = vpop.permute.xlu0 %522
  %v525 = vmul.f32 %v503, %v523
  %v526 = vadd.f32 %v516, %v525
  %528 = vset.pattern.permute.xlu0 0
  %529 = vperm.xlu0 %528, %v478
  %v530 = vpop.permute.xlu0 %529
  %v532 = vmul.f32 %v138, %v530
  %v533 = vadd.f32 %v526, %v532
  %v534 = vmul.f32 %v465, %v533
  %v535 = vsel %vm87, %v534, 0.0
  %536 = vadd.xlane.f32.xlu0 %v535
  %v537 = vpop.xlane.xlu0 %536
  %v538 = vadd.f32 %v410, %v537
  %v539 = vsel %vm87, %v456, -inf
  %540 = vmax.xlane.f32.xlu0 %v539
  %v541 = vpop.xlane.xlu0 %540
  %v542 = vsub.f32 %v456, %v541
  %v543 = vmul.f32 %v542, 1.442695
  %v544 = vpow.pop %v543
  %v546 = vsel %vm87, %v544, 0
  %548 = vmatpush.msra.mxu0 0.0
  %549 = vmatpush.msra.mxu0 0.0
  %550 = vmatpush.msra.mxu0 0.0
  %551 = vmatpush.msra.mxu0 0.0
  %552 = vmatpush.msra.mxu0 0.0
  %553 = vmatpush.msra.mxu0 0.0
  %554 = vmatpush.msra.mxu0 0.0
  %555 = vmatpush.msra.mxu0 0.0
  %556 = vmatpush.msra.mxu0 0.0
  %557 = vmatpush.msra.mxu0 0.0
  %558 = vmatpush.msra.mxu0 0.0
  %559 = vmatpush.msra.mxu0 0.0
  %560 = vmatpush.msra.mxu0 0.0
  %561 = vmatpush.msra.mxu0 0.0
  %562 = vmatpush.msra.mxu0 0.0
  %563 = vmatpush.msra.mxu0 %v162
  %564 = vmatmul.f32.gmra.mxu0 %v546
  %v565 = vpop.f32.mrf.mxu0
  %v566 = vadd.f32 0.0, %v565
  %567 = vdwg.mxu0
  %v568 = vadd.f32 %v541, %v40
  %v569 = vmax.f32 %v566, 1e-30
  %v570 = vlog2.pop %v569
  %v571 = vmul.f32 %v570, 0.6931472
  %v572 = vadd.f32 %v568, %v571
  %v573 = vadd.f32 %v572, %v459
  %p574 = scmp.ge.s32.totalorder %s457, 1
  %s575 = scalar_select %p574, 1, 0
  %v576 = vstv %s575
  %vm577 = vcmp.eq.s32.totalorder %v576, 1
  %vm578 = vmand %vm577, %vm473
  %v579 = vsel %vm578, 1, 0
  %580 = vset.pattern.permute.xlu0 0
  %581 = vperm.xlu0 %580, %v579
  %v582 = vpop.permute.xlu0 %581
  %vm583 = vcmp.eq.s32.totalorder %v582, 1
  %v584 = vsel %vm583, %v573, %v456
  %s585 = sadd.s32 %s60, 4
  %s586 = scalar_lea.vmem %s0, 32
  %v587 = vld [vmem:[%s586] sm:$0xff]
  %588 = vset.pattern.permute.xlu0 4
  %589 = vperm.xlu0 %588, %v62
  %v590 = vpop.permute.xlu0 %589
  %vm591 = vcmp.eq.s32.totalorder %v28, %v590
  %v592 = vsel %vm591, 1, 0
  %v593 = vcvt.s32.f32 %v592
  %594 = vset.pattern.permute.xlu0 4
  %595 = vperm.xlu0 %594, %v63
  %v596 = vpop.permute.xlu0 %595
  %vm597 = vcmp.eq.s32.totalorder %v28, %v596
  %v598 = vsel %vm597, 1, 0
  %v599 = vcvt.s32.f32 %v598
  %v600 = vstv %s585
  %vm601 = vcmp.lt.s32.totalorder %v600, %v26
  %v602 = vsel %vm601, 1, 0
  %v603 = vcvt.s32.f32 %v602
  %vm604 = vcmp.eq.s32.totalorder %v600, %v80
  %v605 = vsel %vm604, 1, 0
  %v606 = vcvt.s32.f32 %v605
  %p607 = scmp.eq.s32.totalorder %s585, 0
  %s608 = scalar_select %p607, 1, 0
  %s609 = scvt.s32.f32 %s608
  %v611 = vsel %vm87, %v599, 0
  %613 = vmatpush.msra.mxu0 0.0
  %614 = vmatpush.msra.mxu0 0.0
  %615 = vmatpush.msra.mxu0 0.0
  %616 = vmatpush.msra.mxu0 0.0
  %617 = vmatpush.msra.mxu0 0.0
  %618 = vmatpush.msra.mxu0 0.0
  %619 = vmatpush.msra.mxu0 0.0
  %620 = vmatpush.msra.mxu0 0.0
  %621 = vmatpush.msra.mxu0 0.0
  %622 = vmatpush.msra.mxu0 0.0
  %623 = vmatpush.msra.mxu0 0.0
  %624 = vmatpush.msra.mxu0 0.0
  %625 = vmatpush.msra.mxu0 0.0
  %626 = vmatpush.msra.mxu0 0.0
  %627 = vmatpush.msra.mxu0 0.0
  %628 = vmatpush.msra.mxu0 %v93
  %629 = vmatmul.f32.gmra.mxu0 %v611
  %v630 = vpop.f32.mrf.mxu0
  %v631 = vadd.f32 0.0, %v630
  %632 = vdwg.mxu0
  %634 = vset.pattern.permute.xlu0 0
  %635 = vperm.xlu0 %634, %v603
  %v636 = vpop.permute.xlu0 %635
  %v638 = vmul.f32 %v587, %v636
  %v639 = vstv %s609
  %v640 = vmul.f32 %v23, %v639
  %v642 = vperm.slane %v640, 0
  %v644 = vadd.f32 %v638, %v642
  %s645 = ssub.f32 1.0, %s609
  %v646 = vstv %s645
  %v647 = vmul.f32 %v603, %v646
  %649 = vset.pattern.permute.xlu0 0
  %650 = vperm.xlu0 %649, %v647
  %v651 = vpop.permute.xlu0 %650
  %v653 = vmul.f32 %v631, %v651
  %v654 = vadd.f32 %v644, %v653
  %656 = vset.pattern.permute.xlu0 0
  %657 = vperm.xlu0 %656, %v606
  %v658 = vpop.permute.xlu0 %657
  %v660 = vmul.f32 %v138, %v658
  %v661 = vadd.f32 %v654, %v660
  %v662 = vmul.f32 %v593, %v661
  %v663 = vsel %vm87, %v662, 0.0
  %664 = vadd.xlane.f32.xlu0 %v663
  %v665 = vpop.xlane.xlu0 %664
  %v666 = vadd.f32 %v538, %v665
  %v667 = vsel %vm87, %v584, -inf
  %668 = vmax.xlane.f32.xlu0 %v667
  %v669 = vpop.xlane.xlu0 %668
  %v670 = vsub.f32 %v584, %v669
  %v671 = vmul.f32 %v670, 1.442695
  %v672 = vpow.pop %v671
  %v674 = vsel %vm87, %v672, 0
  %676 = vmatpush.msra.mxu0 0.0
  %677 = vmatpush.msra.mxu0 0.0
  %678 = vmatpush.msra.mxu0 0.0
  %679 = vmatpush.msra.mxu0 0.0
  %680 = vmatpush.msra.mxu0 0.0
  %681 = vmatpush.msra.mxu0 0.0
  %682 = vmatpush.msra.mxu0 0.0
  %683 = vmatpush.msra.mxu0 0.0
  %684 = vmatpush.msra.mxu0 0.0
  %685 = vmatpush.msra.mxu0 0.0
  %686 = vmatpush.msra.mxu0 0.0
  %687 = vmatpush.msra.mxu0 0.0
  %688 = vmatpush.msra.mxu0 0.0
  %689 = vmatpush.msra.mxu0 0.0
  %690 = vmatpush.msra.mxu0 0.0
  %691 = vmatpush.msra.mxu0 %v162
  %692 = vmatmul.f32.gmra.mxu0 %v674
  %v693 = vpop.f32.mrf.mxu0
  %v694 = vadd.f32 0.0, %v693
  %695 = vdwg.mxu0
  %v696 = vadd.f32 %v669, %v40
  %v697 = vmax.f32 %v694, 1e-30
  %v698 = vlog2.pop %v697
  %v699 = vmul.f32 %v698, 0.6931472
  %v700 = vadd.f32 %v696, %v699
  %v701 = vadd.f32 %v700, %v587
  %p702 = scmp.ge.s32.totalorder %s585, 1
  %s703 = scalar_select %p702, 1, 0
  %v704 = vstv %s703
  %vm705 = vcmp.eq.s32.totalorder %v704, 1
  %vm706 = vmand %vm705, %vm601
  %v707 = vsel %vm706, 1, 0
  %708 = vset.pattern.permute.xlu0 0
  %709 = vperm.xlu0 %708, %v707
  %v710 = vpop.permute.xlu0 %709
  %vm711 = vcmp.eq.s32.totalorder %v710, 1
  %v712 = vsel %vm711, %v701, %v584
  %s713 = sadd.s32 %s60, 5
  %s714 = scalar_lea.vmem %s0, 40
  %v715 = vld [vmem:[%s714] sm:$0xff]
  %716 = vset.pattern.permute.xlu0 5
  %717 = vperm.xlu0 %716, %v62
  %v718 = vpop.permute.xlu0 %717
  %vm719 = vcmp.eq.s32.totalorder %v28, %v718
  %v720 = vsel %vm719, 1, 0
  %v721 = vcvt.s32.f32 %v720
  %722 = vset.pattern.permute.xlu0 5
  %723 = vperm.xlu0 %722, %v63
  %v724 = vpop.permute.xlu0 %723
  %vm725 = vcmp.eq.s32.totalorder %v28, %v724
  %v726 = vsel %vm725, 1, 0
  %v727 = vcvt.s32.f32 %v726
  %v728 = vstv %s713
  %vm729 = vcmp.lt.s32.totalorder %v728, %v26
  %v730 = vsel %vm729, 1, 0
  %v731 = vcvt.s32.f32 %v730
  %vm732 = vcmp.eq.s32.totalorder %v728, %v80
  %v733 = vsel %vm732, 1, 0
  %v734 = vcvt.s32.f32 %v733
  %p735 = scmp.eq.s32.totalorder %s713, 0
  %s736 = scalar_select %p735, 1, 0
  %s737 = scvt.s32.f32 %s736
  %v739 = vsel %vm87, %v727, 0
  %741 = vmatpush.msra.mxu0 0.0
  %742 = vmatpush.msra.mxu0 0.0
  %743 = vmatpush.msra.mxu0 0.0
  %744 = vmatpush.msra.mxu0 0.0
  %745 = vmatpush.msra.mxu0 0.0
  %746 = vmatpush.msra.mxu0 0.0
  %747 = vmatpush.msra.mxu0 0.0
  %748 = vmatpush.msra.mxu0 0.0
  %749 = vmatpush.msra.mxu0 0.0
  %750 = vmatpush.msra.mxu0 0.0
  %751 = vmatpush.msra.mxu0 0.0
  %752 = vmatpush.msra.mxu0 0.0
  %753 = vmatpush.msra.mxu0 0.0
  %754 = vmatpush.msra.mxu0 0.0
  %755 = vmatpush.msra.mxu0 0.0
  %756 = vmatpush.msra.mxu0 %v93
  %757 = vmatmul.f32.gmra.mxu0 %v739
  %v758 = vpop.f32.mrf.mxu0
  %v759 = vadd.f32 0.0, %v758
  %760 = vdwg.mxu0
  %762 = vset.pattern.permute.xlu0 0
  %763 = vperm.xlu0 %762, %v731
  %v764 = vpop.permute.xlu0 %763
  %v766 = vmul.f32 %v715, %v764
  %v767 = vstv %s737
  %v768 = vmul.f32 %v23, %v767
  %v770 = vperm.slane %v768, 0
  %v772 = vadd.f32 %v766, %v770
  %s773 = ssub.f32 1.0, %s737
  %v774 = vstv %s773
  %v775 = vmul.f32 %v731, %v774
  %777 = vset.pattern.permute.xlu0 0
  %778 = vperm.xlu0 %777, %v775
  %v779 = vpop.permute.xlu0 %778
  %v781 = vmul.f32 %v759, %v779
  %v782 = vadd.f32 %v772, %v781
  %784 = vset.pattern.permute.xlu0 0
  %785 = vperm.xlu0 %784, %v734
  %v786 = vpop.permute.xlu0 %785
  %v788 = vmul.f32 %v138, %v786
  %v789 = vadd.f32 %v782, %v788
  %v790 = vmul.f32 %v721, %v789
  %v791 = vsel %vm87, %v790, 0.0
  %792 = vadd.xlane.f32.xlu0 %v791
  %v793 = vpop.xlane.xlu0 %792
  %v794 = vadd.f32 %v666, %v793
  %v795 = vsel %vm87, %v712, -inf
  %796 = vmax.xlane.f32.xlu0 %v795
  %v797 = vpop.xlane.xlu0 %796
  %v798 = vsub.f32 %v712, %v797
  %v799 = vmul.f32 %v798, 1.442695
  %v800 = vpow.pop %v799
  %v802 = vsel %vm87, %v800, 0
  %804 = vmatpush.msra.mxu0 0.0
  %805 = vmatpush.msra.mxu0 0.0
  %806 = vmatpush.msra.mxu0 0.0
  %807 = vmatpush.msra.mxu0 0.0
  %808 = vmatpush.msra.mxu0 0.0
  %809 = vmatpush.msra.mxu0 0.0
  %810 = vmatpush.msra.mxu0 0.0
  %811 = vmatpush.msra.mxu0 0.0
  %812 = vmatpush.msra.mxu0 0.0
  %813 = vmatpush.msra.mxu0 0.0
  %814 = vmatpush.msra.mxu0 0.0
  %815 = vmatpush.msra.mxu0 0.0
  %816 = vmatpush.msra.mxu0 0.0
  %817 = vmatpush.msra.mxu0 0.0
  %818 = vmatpush.msra.mxu0 0.0
  %819 = vmatpush.msra.mxu0 %v162
  %820 = vmatmul.f32.gmra.mxu0 %v802
  %v821 = vpop.f32.mrf.mxu0
  %v822 = vadd.f32 0.0, %v821
  %823 = vdwg.mxu0
  %v824 = vadd.f32 %v797, %v40
  %v825 = vmax.f32 %v822, 1e-30
  %v826 = vlog2.pop %v825
  %v827 = vmul.f32 %v826, 0.6931472
  %v828 = vadd.f32 %v824, %v827
  %v829 = vadd.f32 %v828, %v715
  %p830 = scmp.ge.s32.totalorder %s713, 1
  %s831 = scalar_select %p830, 1, 0
  %v832 = vstv %s831
  %vm833 = vcmp.eq.s32.totalorder %v832, 1
  %vm834 = vmand %vm833, %vm729
  %v835 = vsel %vm834, 1, 0
  %836 = vset.pattern.permute.xlu0 0
  %837 = vperm.xlu0 %836, %v835
  %v838 = vpop.permute.xlu0 %837
  %vm839 = vcmp.eq.s32.totalorder %v838, 1
  %v840 = vsel %vm839, %v829, %v712
  %s841 = sadd.s32 %s60, 6
  %s842 = scalar_lea.vmem %s0, 48
  %v843 = vld [vmem:[%s842] sm:$0xff]
  %844 = vset.pattern.permute.xlu0 6
  %845 = vperm.xlu0 %844, %v62
  %v846 = vpop.permute.xlu0 %845
  %vm847 = vcmp.eq.s32.totalorder %v28, %v846
  %v848 = vsel %vm847, 1, 0
  %v849 = vcvt.s32.f32 %v848
  %850 = vset.pattern.permute.xlu0 6
  %851 = vperm.xlu0 %850, %v63
  %v852 = vpop.permute.xlu0 %851
  %vm853 = vcmp.eq.s32.totalorder %v28, %v852
  %v854 = vsel %vm853, 1, 0
  %v855 = vcvt.s32.f32 %v854
  %v856 = vstv %s841
  %vm857 = vcmp.lt.s32.totalorder %v856, %v26
  %v858 = vsel %vm857, 1, 0
  %v859 = vcvt.s32.f32 %v858
  %vm860 = vcmp.eq.s32.totalorder %v856, %v80
  %v861 = vsel %vm860, 1, 0
  %v862 = vcvt.s32.f32 %v861
  %p863 = scmp.eq.s32.totalorder %s841, 0
  %s864 = scalar_select %p863, 1, 0
  %s865 = scvt.s32.f32 %s864
  %v867 = vsel %vm87, %v855, 0
  %869 = vmatpush.msra.mxu0 0.0
  %870 = vmatpush.msra.mxu0 0.0
  %871 = vmatpush.msra.mxu0 0.0
  %872 = vmatpush.msra.mxu0 0.0
  %873 = vmatpush.msra.mxu0 0.0
  %874 = vmatpush.msra.mxu0 0.0
  %875 = vmatpush.msra.mxu0 0.0
  %876 = vmatpush.msra.mxu0 0.0
  %877 = vmatpush.msra.mxu0 0.0
  %878 = vmatpush.msra.mxu0 0.0
  %879 = vmatpush.msra.mxu0 0.0
  %880 = vmatpush.msra.mxu0 0.0
  %881 = vmatpush.msra.mxu0 0.0
  %882 = vmatpush.msra.mxu0 0.0
  %883 = vmatpush.msra.mxu0 0.0
  %884 = vmatpush.msra.mxu0 %v93
  %885 = vmatmul.f32.gmra.mxu0 %v867
  %v886 = vpop.f32.mrf.mxu0
  %v887 = vadd.f32 0.0, %v886
  %888 = vdwg.mxu0
  %890 = vset.pattern.permute.xlu0 0
  %891 = vperm.xlu0 %890, %v859
  %v892 = vpop.permute.xlu0 %891
  %v894 = vmul.f32 %v843, %v892
  %v895 = vstv %s865
  %v896 = vmul.f32 %v23, %v895
  %v898 = vperm.slane %v896, 0
  %v900 = vadd.f32 %v894, %v898
  %s901 = ssub.f32 1.0, %s865
  %v902 = vstv %s901
  %v903 = vmul.f32 %v859, %v902
  %905 = vset.pattern.permute.xlu0 0
  %906 = vperm.xlu0 %905, %v903
  %v907 = vpop.permute.xlu0 %906
  %v909 = vmul.f32 %v887, %v907
  %v910 = vadd.f32 %v900, %v909
  %912 = vset.pattern.permute.xlu0 0
  %913 = vperm.xlu0 %912, %v862
  %v914 = vpop.permute.xlu0 %913
  %v916 = vmul.f32 %v138, %v914
  %v917 = vadd.f32 %v910, %v916
  %v918 = vmul.f32 %v849, %v917
  %v919 = vsel %vm87, %v918, 0.0
  %920 = vadd.xlane.f32.xlu0 %v919
  %v921 = vpop.xlane.xlu0 %920
  %v922 = vadd.f32 %v794, %v921
  %v923 = vsel %vm87, %v840, -inf
  %924 = vmax.xlane.f32.xlu0 %v923
  %v925 = vpop.xlane.xlu0 %924
  %v926 = vsub.f32 %v840, %v925
  %v927 = vmul.f32 %v926, 1.442695
  %v928 = vpow.pop %v927
  %v930 = vsel %vm87, %v928, 0
  %932 = vmatpush.msra.mxu0 0.0
  %933 = vmatpush.msra.mxu0 0.0
  %934 = vmatpush.msra.mxu0 0.0
  %935 = vmatpush.msra.mxu0 0.0
  %936 = vmatpush.msra.mxu0 0.0
  %937 = vmatpush.msra.mxu0 0.0
  %938 = vmatpush.msra.mxu0 0.0
  %939 = vmatpush.msra.mxu0 0.0
  %940 = vmatpush.msra.mxu0 0.0
  %941 = vmatpush.msra.mxu0 0.0
  %942 = vmatpush.msra.mxu0 0.0
  %943 = vmatpush.msra.mxu0 0.0
  %944 = vmatpush.msra.mxu0 0.0
  %945 = vmatpush.msra.mxu0 0.0
  %946 = vmatpush.msra.mxu0 0.0
  %947 = vmatpush.msra.mxu0 %v162
  %948 = vmatmul.f32.gmra.mxu0 %v930
  %v949 = vpop.f32.mrf.mxu0
  %v950 = vadd.f32 0.0, %v949
  %951 = vdwg.mxu0
  %v952 = vadd.f32 %v925, %v40
  %v953 = vmax.f32 %v950, 1e-30
  %v954 = vlog2.pop %v953
  %v955 = vmul.f32 %v954, 0.6931472
  %v956 = vadd.f32 %v952, %v955
  %v957 = vadd.f32 %v956, %v843
  %p958 = scmp.ge.s32.totalorder %s841, 1
  %s959 = scalar_select %p958, 1, 0
  %v960 = vstv %s959
  %vm961 = vcmp.eq.s32.totalorder %v960, 1
  %vm962 = vmand %vm961, %vm857
  %v963 = vsel %vm962, 1, 0
  %964 = vset.pattern.permute.xlu0 0
  %965 = vperm.xlu0 %964, %v963
  %v966 = vpop.permute.xlu0 %965
  %vm967 = vcmp.eq.s32.totalorder %v966, 1
  %v968 = vsel %vm967, %v957, %v840
  %s969 = sadd.s32 %s60, 7
  %s970 = scalar_lea.vmem %s0, 56
  %v971 = vld [vmem:[%s970] sm:$0xff]
  %972 = vset.pattern.permute.xlu0 7
  %973 = vperm.xlu0 %972, %v62
  %v974 = vpop.permute.xlu0 %973
  %vm975 = vcmp.eq.s32.totalorder %v28, %v974
  %v976 = vsel %vm975, 1, 0
  %v977 = vcvt.s32.f32 %v976
  %978 = vset.pattern.permute.xlu0 7
  %979 = vperm.xlu0 %978, %v63
  %v980 = vpop.permute.xlu0 %979
  %vm981 = vcmp.eq.s32.totalorder %v28, %v980
  %v982 = vsel %vm981, 1, 0
  %v983 = vcvt.s32.f32 %v982
  %v984 = vstv %s969
  %vm985 = vcmp.lt.s32.totalorder %v984, %v26
  %v986 = vsel %vm985, 1, 0
  %v987 = vcvt.s32.f32 %v986
  %vm988 = vcmp.eq.s32.totalorder %v984, %v80
  %v989 = vsel %vm988, 1, 0
  %v990 = vcvt.s32.f32 %v989
  %p991 = scmp.eq.s32.totalorder %s969, 0
  %s992 = scalar_select %p991, 1, 0
  %s993 = scvt.s32.f32 %s992
  %v995 = vsel %vm87, %v983, 0
  %997 = vmatpush.msra.mxu0 0.0
  %998 = vmatpush.msra.mxu0 0.0
  %999 = vmatpush.msra.mxu0 0.0
  %1000 = vmatpush.msra.mxu0 0.0
  %1001 = vmatpush.msra.mxu0 0.0
  %1002 = vmatpush.msra.mxu0 0.0
  %1003 = vmatpush.msra.mxu0 0.0
  %1004 = vmatpush.msra.mxu0 0.0
  %1005 = vmatpush.msra.mxu0 0.0
  %1006 = vmatpush.msra.mxu0 0.0
  %1007 = vmatpush.msra.mxu0 0.0
  %1008 = vmatpush.msra.mxu0 0.0
  %1009 = vmatpush.msra.mxu0 0.0
  %1010 = vmatpush.msra.mxu0 0.0
  %1011 = vmatpush.msra.mxu0 0.0
  %1012 = vmatpush.msra.mxu0 %v93
  %1013 = vmatmul.f32.gmra.mxu0 %v995
  %v1014 = vpop.f32.mrf.mxu0
  %v1015 = vadd.f32 0.0, %v1014
  %1016 = vdwg.mxu0
  %1018 = vset.pattern.permute.xlu0 0
  %1019 = vperm.xlu0 %1018, %v987
  %v1020 = vpop.permute.xlu0 %1019
  %v1022 = vmul.f32 %v971, %v1020
  %v1023 = vstv %s993
  %v1024 = vmul.f32 %v23, %v1023
  %v1026 = vperm.slane %v1024, 0
  %v1028 = vadd.f32 %v1022, %v1026
  %s1029 = ssub.f32 1.0, %s993
  %v1030 = vstv %s1029
  %v1031 = vmul.f32 %v987, %v1030
  %1033 = vset.pattern.permute.xlu0 0
  %1034 = vperm.xlu0 %1033, %v1031
  %v1035 = vpop.permute.xlu0 %1034
  %v1037 = vmul.f32 %v1015, %v1035
  %v1038 = vadd.f32 %v1028, %v1037
  %1040 = vset.pattern.permute.xlu0 0
  %1041 = vperm.xlu0 %1040, %v990
  %v1042 = vpop.permute.xlu0 %1041
  %v1044 = vmul.f32 %v138, %v1042
  %v1045 = vadd.f32 %v1038, %v1044
  %v1046 = vmul.f32 %v977, %v1045
  %v1047 = vsel %vm87, %v1046, 0.0
  %1048 = vadd.xlane.f32.xlu0 %v1047
  %v1049 = vpop.xlane.xlu0 %1048
  %v1050 = vadd.f32 %v922, %v1049
  %v1051 = vsel %vm87, %v968, -inf
  %1052 = vmax.xlane.f32.xlu0 %v1051
  %v1053 = vpop.xlane.xlu0 %1052
  %v1054 = vsub.f32 %v968, %v1053
  %v1055 = vmul.f32 %v1054, 1.442695
  %v1056 = vpow.pop %v1055
  %v1058 = vsel %vm87, %v1056, 0
  %1060 = vmatpush.msra.mxu0 0.0
  %1061 = vmatpush.msra.mxu0 0.0
  %1062 = vmatpush.msra.mxu0 0.0
  %1063 = vmatpush.msra.mxu0 0.0
  %1064 = vmatpush.msra.mxu0 0.0
  %1065 = vmatpush.msra.mxu0 0.0
  %1066 = vmatpush.msra.mxu0 0.0
  %1067 = vmatpush.msra.mxu0 0.0
  %1068 = vmatpush.msra.mxu0 0.0
  %1069 = vmatpush.msra.mxu0 0.0
  %1070 = vmatpush.msra.mxu0 0.0
  %1071 = vmatpush.msra.mxu0 0.0
  %1072 = vmatpush.msra.mxu0 0.0
  %1073 = vmatpush.msra.mxu0 0.0
  %1074 = vmatpush.msra.mxu0 0.0
  %1075 = vmatpush.msra.mxu0 %v162
  %1076 = vmatmul.f32.gmra.mxu0 %v1058
  %v1077 = vpop.f32.mrf.mxu0
  %v1078 = vadd.f32 0.0, %v1077
  %1079 = vdwg.mxu0
  %v1080 = vadd.f32 %v1053, %v40
  %v1081 = vmax.f32 %v1078, 1e-30
  %v1082 = vlog2.pop %v1081
  %v1083 = vmul.f32 %v1082, 0.6931472
  %v1084 = vadd.f32 %v1080, %v1083
  %v1085 = vadd.f32 %v1084, %v971
  %p1086 = scmp.ge.s32.totalorder %s969, 1
  %s1087 = scalar_select %p1086, 1, 0
  %v1088 = vstv %s1087
  %vm1089 = vcmp.eq.s32.totalorder %v1088, 1
  %vm1090 = vmand %vm1089, %vm985
  %v1091 = vsel %vm1090, 1, 0
  %1092 = vset.pattern.permute.xlu0 0
  %1093 = vperm.xlu0 %1092, %v1091
  %v1094 = vpop.permute.xlu0 %1093
  %vm1095 = vcmp.eq.s32.totalorder %v1094, 1
  %v1096 = vsel %vm1095, %v1085, %v968
  %1097 = vst.msk [vmem:[#allocation2] sm:$0xff] %vm87, %v1096
  %vm1098 = vcmask 7168
  %1099 = vst.msk [vmem:[#allocation3] sm:$0xff] %vm1098, %v1050
  // Predicated region
  $region30: #{tpu_custom_call.1} parent=0 // pred_check
    %p1100 = pneg %p44
  $region31: #{tpu_custom_call.1} parent=0 // pred_check_branch
    %1102 = sbr.rel (%p1100) target = $region33
  $region32: #{tpu_custom_call.1} parent=0 // pred_region
    %v1103 = vadd.f32 %v1096, %v138
    %v1104 = vsel %vm87, %v1103, -inf
    %1105 = vmax.xlane.f32.xlu0 %v1104
    %v1106 = vpop.xlane.xlu0 %1105
    %v1107 = vsub.f32 %v1103, %v1106
    %v1108 = vmul.f32 %v1107, 1.442695
    %v1109 = vpow.pop %v1108
    %v1110 = vsel %vm87, %v1109, 0.0
    %1111 = vadd.xlane.f32.xlu0 %v1110
    %v1112 = vpop.xlane.xlu0 %1111
    %v1113 = vlog2.pop %v1112
    %v1114 = vmul.f32 %v1113, 0.6931472
    %v1115 = vadd.f32 %v1106, %v1114
    %v1116 = vsub.f32 %v1050, %v1115
    %1117 = vst.msk [vmem:[%s6] sm:$0xff] %vm1098, %v1116
  $region33: #{tpu_custom_call.1} parent=0 // pred_fallthru
    _
  // Predicated region
  $region34: #{tpu_custom_call.1} parent=0 // pred_check
    _
  $region35: #{tpu_custom_call.1} parent=0 // pred_check_branch
    %1119 = sbr.rel (0) target = $region37
  $region36: #{tpu_custom_call.1} parent=0 // pred_region
    _
  $region37: #{tpu_custom_call.1} parent=0 // pred_fallthru
    _
  // Predicated region
  $region38: #{tpu_custom_call.1} parent=0 // pred_check
    _
  $region39: #{tpu_custom_call.1} parent=0 // pred_check_branch
    %1121 = sbr.rel (0) target = $region41
  $region40: #{tpu_custom_call.1} parent=0 // pred_region
    _
  $region41: #{tpu_custom_call.1} parent=0 // pred_fallthru
    _

</llo_original>
